<compile_context>
chip_gen: v5e
topology: v5e:2x2
jax: 0.10.0
libtpu: 0.0.40
codegen_flags: <defaults>
</compile_context>

<pallas_src>
import numpy as np
import jax
import jax.numpy as jnp
from jax import lax
from jax.experimental import pallas as pl
from jax.experimental.pallas import tpu as pltpu


# ----------------------------- Pallas kernel -------------------------------

def _make_fused_kernel(H, W, Ch, windows, head_splits):
    """Depthwise kxk 'same' conv + bias, fused with the q multiply.

    One grid step = one batch image.  Ref shapes:
      v_ref / q_ref / o_ref : (1, h, H, W*Ch)   (sublanes = H, lanes = W*Ch)
      w_ref                 : (h, kmax*kmax, W*Ch)  pre-tiled, W-validity folded in
      b_ref                 : (h, 1, W*Ch)
    Heads are a static Python loop grouped by window size, so each head only
    executes its own k*k taps; rolls stay on 2-D (H, WC) operands.
    """
    WC = W * Ch

    def kernel(v_ref, q_ref, w_ref, b_ref, o_ref):
        # Output-row index, shared by all heads (hoisted; used only in masks).
        row = lax.broadcasted_iota(jnp.int32, (H, WC), 0)

        g0 = 0
        for k_sz, hs in zip(windows, head_splits):
            pad = k_sz // 2
            for hh in range(hs):
                gh = g0 + hh
                vg = v_ref[0, gh].astype(jnp.float32)            # (H, WC)

                # --- sublane (H) taps: one roll (+ boundary mask) per dh ----
                vhs = []
                for ki in range(k_sz):
                    dh = ki - pad
                    if dh == 0:
                        vh = vg
                    else:
                        # vh[y] = v[y + dh]; wrapped rows masked to zero
                        vh = pltpu.roll(vg, shift=(-dh) % H, axis=0)
                        if dh > 0:
                            vh = jnp.where(row < H - dh, vh, 0.0)
                        else:
                            vh = jnp.where(row >= -dh, vh, 0.0)
                    vhs.append(vh)

                # --- lane (W) taps: reduce over dh, then ONE lane roll ------
                acc = jnp.broadcast_to(b_ref[gh].astype(jnp.float32), (H, WC))
                for kj in range(k_sz):
                    dw = kj - pad
                    t = None
                    for ki in range(k_sz):
                        idx = ki * k_sz + kj
                        wv = w_ref[gh, idx:idx + 1, :].astype(jnp.float32)  # (1, WC)
                        term = vhs[ki] * wv
                        t = term if t is None else t + term
                    if dw != 0:
                        # A W shift is a lane shift by dw*Ch; wrapped lanes
                        # carry zero weight (input-column validity folded into
                        # the pre-tiled weights), so no in-kernel lane mask.
                        t = pltpu.roll(t, shift=(-dw * Ch) % WC, axis=1)
                    acc = acc + t

                o_ref[0, gh] = (acc * q_ref[0, gh].astype(jnp.float32)
                                ).astype(o_ref.dtype)
            g0 += hs

    return kernel


# ----------------------------- Module wrapper -------------------------------

class ConvRelPosEncPallas:
    """Mirrors mmdet3d ConvRelPosEnc.__init__ / forward with Pallas compute."""

    def __init__(self, Ch, h, window, key):
        if isinstance(window, int):
            window = {window: h}
        self.Ch = Ch
        self.h = h
        self.window = window
        self.windows = list(window.keys())
        self.head_splits = list(window.values())
        self.channel_splits = [hs * Ch for hs in self.head_splits]
        assert sum(self.head_splits) == h
        for k_sz in self.windows:
            assert k_sz % 2 == 1, "only odd window sizes match PyTorch padding=k//2"

        self.weights = []
        self.biases = []
        for k_sz, hs in window.items():
            C = hs * Ch
            key, wk, bk = jax.random.split(key, 3)
            # depthwise Conv2d weight shape: (C, 1, k, k), bias: (C,)
            fan_in = k_sz * k_sz
            bound = 1.0 / np.sqrt(fan_in)
            w = jax.random.uniform(wk, (C, 1, k_sz, k_sz), jnp.float32,
                                   -bound, bound)
            b = jax.random.uniform(bk, (C,), jnp.float32, -bound, bound)
            self.weights.append(w)
            self.biases.append(b)

        self._param_cache = {}   # W -> (kmax, w_lane, b_lane)

    def _fused_params(self, W):
        """Per-head weights/bias tiled over the (W, Ch) lane axis (cached).

        The W-boundary zeroing of the 'same' conv is folded into the weights
        as *input*-column validity: the kernel multiplies the weight at input
        column x and only afterwards lane-rolls by dw, so the value at input
        column x lands at output column x - dw, which must lie in [0, W).
        Each group keeps its native k*k taps (tap axis zero-padded to
        kmax*kmax only so all heads share one array shape).
        """
        if W in self._param_cache:
            return self._param_cache[W]

        kmax = max(self.windows)
        Ch = self.Ch
        WC = W * Ch
        x_idx = np.arange(W)

        w_parts, b_parts = [], []
        for k_sz, hs, wt, bs in zip(self.windows, self.head_splits,
                                    self.weights, self.biases):
            pad = k_sz // 2
            taps = np.arange(k_sz * k_sz)
            dw = (taps % k_sz) - pad                               # per-tap W offset
            xo = x_idx[None, :] - dw[:, None]                      # output column fed
            valid_in = jnp.asarray(((xo >= 0) & (xo < W)).astype(np.float32))  # (k*k, W)

            w_sp = jnp.transpose(wt[:, 0], (1, 2, 0))              # (k, k, hs*Ch)
            w_sp = w_sp.reshape(k_sz * k_sz, hs, Ch).transpose(1, 0, 2)  # (hs, k*k, Ch)
            w_tile = w_sp[:, :, None, :] * valid_in[None, :, :, None]    # (hs,k*k,W,Ch)
            w_tile = w_tile.reshape(hs, k_sz * k_sz, WC)
            if k_sz < kmax:
                w_tile = jnp.pad(
                    w_tile, ((0, 0), (0, kmax * kmax - k_sz * k_sz), (0, 0)))
            w_parts.append(w_tile)

            b_tile = jnp.tile(bs.reshape(hs, 1, Ch), (1, W, 1)).reshape(hs, 1, WC)
            b_parts.append(b_tile)

        result = (kmax, jnp.concatenate(w_parts, 0), jnp.concatenate(b_parts, 0))
        self._param_cache[W] = result
        return result

    def __call__(self, q, v, size):
        B, h, N, Ch = q.shape
        H, W = size
        assert N == H * W and h == self.h and Ch == self.Ch
        WC = W * Ch
        kmax, w_lane, b_lane = self._fused_params(W)

        # Free (contiguous) reshapes: (B,h,N,Ch) -> (B,h,H,W*Ch), lane = x*Ch+ch.
        # At test size WC = 128 -> lane-dense, unmasked stores.
        q_r = q.reshape(B, h, H, WC)
        v_r = v.reshape(B, h, H, WC)

        # NOTE: one block = all h head images of a batch (~h*H*WC*4 bytes for
        # q/v/out each).  At production sizes keep
        #   3 arrays x 2 pipeline buffers x block_bytes + resident weights
        # under the scoped VMEM limit (v7x has only 64 MiB physical VMEM); if
        # needed split the head axis into chunks via a second grid dimension.
        kernel = _make_fused_kernel(H, W, Ch, self.windows, self.head_splits)
        out = pl.pallas_call(
            kernel,
            out_shape=jax.ShapeDtypeStruct((B, h, H, WC), q.dtype),
            grid=(B,),
            in_specs=[
                pl.BlockSpec((1, h, H, WC), lambda b: (b, 0, 0, 0)),        # v
                pl.BlockSpec((1, h, H, WC), lambda b: (b, 0, 0, 0)),        # q
                pl.BlockSpec((h, kmax * kmax, WC), lambda b: (0, 0, 0)),    # w (resident)
                pl.BlockSpec((h, 1, WC), lambda b: (0, 0, 0)),              # bias (resident)
            ],
            out_specs=pl.BlockSpec((1, h, H, WC), lambda b: (b, 0, 0, 0)),
            compiler_params=pltpu.CompilerParams(
                dimension_semantics=("parallel",)),
        )(v_r, q_r, w_lane, b_lane)

        return out.reshape(B, h, N, Ch)


# ----------------------------- Pure-JAX reference ---------------------------

def _ref_forward(module, q, v, size):
    B, h, N, Ch = q.shape
    H, W = size
    # 'B h (H W) Ch -> B (h Ch) H W'
    v_img = (v.reshape(B, h, H, W, Ch)
              .transpose(0, 1, 4, 2, 3)
              .reshape(B, h * Ch, H, W))
    conv_outs = []
    ch_off = 0
    for k_sz, w, b, csplit in zip(module.windows, module.weights,
                                  module.biases, module.channel_splits):
        x = v_img[:, ch_off:ch_off + csplit]
        pad = k_sz // 2
        y = lax.conv_general_dilated(
            x, w, window_strides=(1, 1), padding=((pad, pad), (pad, pad)),
            dimension_numbers=('NCHW', 'OIHW', 'NCHW'),
            feature_group_count=csplit)
        y = y + b[None, :, None, None]
        conv_outs.append(y)
        ch_off += csplit
    conv_v = jnp.concatenate(conv_outs, axis=1)
    # 'B (h Ch) H W -> B h (H W) Ch'
    conv_v = (conv_v.reshape(B, h, Ch, H, W)
                    .transpose(0, 1, 3, 4, 2)
                    .reshape(B, h, N, Ch))
    return q * conv_v


# ----------------------------- Main -----------------------------------------

if __name__ == "__main__":
    key = jax.random.PRNGKey(0)
    B, h, Ch, H, W = 2, 4, 8, 16, 16       # W*Ch = 128 -> lane-dense blocks
    N = H * W
    window = {3: 2, 5: 2}                  # two head groups: 3x3 and 5x5 conv

    key, kq, kv, kp = jax.random.split(key, 4)
    q = jax.random.normal(kq, (B, h, N, Ch), jnp.float32)
    v = jax.random.normal(kv, (B, h, N, Ch), jnp.float32)

    module = ConvRelPosEncPallas(Ch, h, window, kp)

    out = jax.block_until_ready(module(q, v, (H, W)))

    ref = _ref_forward(module, q, v, (H, W))
    assert out.shape == (B, h, N, Ch)
    np.testing.assert_allclose(np.asarray(out), np.asarray(ref),
                               rtol=1e-5, atol=1e-5)
    print("KERNEL_OK")
</pallas_src>

<mosaic_0001>
module attributes {stable_mosaic.version = 11 : i64} {
  func.func @kernel(%arg0: i32, %arg1: memref<1x4x16x128xf32, #tpu.memory_space<vmem>>, %arg2: memref<1x4x16x128xf32, #tpu.memory_space<vmem>>, %arg3: memref<4x25x128xf32, #tpu.memory_space<vmem>>, %arg4: memref<4x1x128xf32, #tpu.memory_space<vmem>>, %arg5: memref<1x4x16x128xf32, #tpu.memory_space<vmem>>) attributes {dimension_semantics = [#tpu.dimension_semantics<parallel>], iteration_bounds = array<i64: 2>, scalar_prefetch = 0 : i64, scratch_operands = 0 : i64, tpu.core_type = #tpu.core_type<tc>, window_params = [{transform_indices = @transform_0, window_bounds = array<i64: 1, 4, 16, 128>}, {transform_indices = @transform_1, window_bounds = array<i64: 1, 4, 16, 128>}, {pipeline_mode = #tpu.pipeline_mode<synchronous>, transform_indices = @transform_2, window_bounds = array<i64: 4, 25, 128>}, {pipeline_mode = #tpu.pipeline_mode<synchronous>, transform_indices = @transform_3, window_bounds = array<i64: 4, 1, 128>}, {transform_indices = @transform_4, window_bounds = array<i64: 1, 4, 16, 128>}]} {
    %0 = tpu.iota {dimensions = array<i32: 0>} : vector<16x128xi32>
    %c0 = arith.constant 0 : index
    %c0_0 = arith.constant 0 : index
    %c0_1 = arith.constant 0 : index
    %c0_2 = arith.constant 0 : index
    %1 = vector.load %arg1[%c0, %c0_0, %c0_1, %c0_2] : memref<1x4x16x128xf32, #tpu.memory_space<vmem>>, vector<1x1x16x128xf32>
    %2 = vector.shape_cast %1 : vector<1x1x16x128xf32> to vector<16x128xf32>
    %c1_i32 = arith.constant 1 : i32
    %3 = tpu.dynamic_rotate %2 by %c1_i32 dim 0 : vector<16x128xf32>, i32 -> vector<16x128xf32>
    %c1_i32_3 = arith.constant 1 : i32
    %4 = vector.broadcast %c1_i32_3 : i32 to vector<16x128xi32>
    %5 = arith.cmpi sge, %0, %4 : vector<16x128xi32>
    %cst = arith.constant 0.000000e+00 : f32
    %6 = vector.broadcast %cst : f32 to vector<16x128xf32>
    %7 = arith.select %5, %3, %6 : vector<16x128xi1>, vector<16x128xf32>
    %c15_i32 = arith.constant 15 : i32
    %8 = tpu.dynamic_rotate %2 by %c15_i32 dim 0 : vector<16x128xf32>, i32 -> vector<16x128xf32>
    %c15_i32_4 = arith.constant 15 : i32
    %9 = vector.broadcast %c15_i32_4 : i32 to vector<16x128xi32>
    %10 = arith.cmpi slt, %0, %9 : vector<16x128xi32>
    %cst_5 = arith.constant 0.000000e+00 : f32
    %11 = vector.broadcast %cst_5 : f32 to vector<16x128xf32>
    %12 = arith.select %10, %8, %11 : vector<16x128xi1>, vector<16x128xf32>
    %c0_6 = arith.constant 0 : index
    %c0_7 = arith.constant 0 : index
    %c0_8 = arith.constant 0 : index
    %13 = vector.load %arg4[%c0_6, %c0_7, %c0_8] : memref<4x1x128xf32, #tpu.memory_space<vmem>>, vector<1x1x128xf32>
    %14 = vector.shape_cast %13 : vector<1x1x128xf32> to vector<1x128xf32>
    %15 = vector.shape_cast %14 : vector<1x128xf32> to vector<1x128xf32>
    %16 = vector.broadcast %15 : vector<1x128xf32> to vector<16x128xf32>
    %c0_9 = arith.constant 0 : index
    %c0_10 = arith.constant 0 : index
    %c0_11 = arith.constant 0 : index
    %17 = vector.load %arg3[%c0_9, %c0_10, %c0_11] : memref<4x25x128xf32, #tpu.memory_space<vmem>>, vector<1x1x128xf32>
    %18 = vector.shape_cast %17 : vector<1x1x128xf32> to vector<1x128xf32>
    %19 = vector.broadcast %18 : vector<1x128xf32> to vector<16x128xf32>
    %20 = arith.mulf %7, %19 : vector<16x128xf32>
    %c0_12 = arith.constant 0 : index
    %c3 = arith.constant 3 : index
    %c0_13 = arith.constant 0 : index
    %21 = vector.load %arg3[%c0_12, %c3, %c0_13] : memref<4x25x128xf32, #tpu.memory_space<vmem>>, vector<1x1x128xf32>
    %22 = vector.shape_cast %21 : vector<1x1x128xf32> to vector<1x128xf32>
    %23 = vector.broadcast %22 : vector<1x128xf32> to vector<16x128xf32>
    %24 = arith.mulf %2, %23 : vector<16x128xf32>
    %25 = arith.addf %20, %24 : vector<16x128xf32>
    %c0_14 = arith.constant 0 : index
    %c6 = arith.constant 6 : index
    %c0_15 = arith.constant 0 : index
    %26 = vector.load %arg3[%c0_14, %c6, %c0_15] : memref<4x25x128xf32, #tpu.memory_space<vmem>>, vector<1x1x128xf32>
    %27 = vector.shape_cast %26 : vector<1x1x128xf32> to vector<1x128xf32>
    %28 = vector.broadcast %27 : vector<1x128xf32> to vector<16x128xf32>
    %29 = arith.mulf %12, %28 : vector<16x128xf32>
    %30 = arith.addf %25, %29 : vector<16x128xf32>
    %c8_i32 = arith.constant 8 : i32
    %31 = tpu.dynamic_rotate %30 by %c8_i32 dim 1 : vector<16x128xf32>, i32 -> vector<16x128xf32>
    %32 = arith.addf %16, %31 : vector<16x128xf32>
    %c0_16 = arith.constant 0 : index
    %c1 = arith.constant 1 : index
    %c0_17 = arith.constant 0 : index
    %33 = vector.load %arg3[%c0_16, %c1, %c0_17] : memref<4x25x128xf32, #tpu.memory_space<vmem>>, vector<1x1x128xf32>
    %34 = vector.shape_cast %33 : vector<1x1x128xf32> to vector<1x128xf32>
    %35 = vector.broadcast %34 : vector<1x128xf32> to vector<16x128xf32>
    %36 = arith.mulf %7, %35 : vector<16x128xf32>
    %c0_18 = arith.constant 0 : index
    %c4 = arith.constant 4 : index
    %c0_19 = arith.constant 0 : index
    %37 = vector.load %arg3[%c0_18, %c4, %c0_19] : memref<4x25x128xf32, #tpu.memory_space<vmem>>, vector<1x1x128xf32>
    %38 = vector.shape_cast %37 : vector<1x1x128xf32> to vector<1x128xf32>
    %39 = vector.broadcast %38 : vector<1x128xf32> to vector<16x128xf32>
    %40 = arith.mulf %2, %39 : vector<16x128xf32>
    %41 = arith.addf %36, %40 : vector<16x128xf32>
    %c0_20 = arith.constant 0 : index
    %c7 = arith.constant 7 : index
    %c0_21 = arith.constant 0 : index
    %42 = vector.load %arg3[%c0_20, %c7, %c0_21] : memref<4x25x128xf32, #tpu.memory_space<vmem>>, vector<1x1x128xf32>
    %43 = vector.shape_cast %42 : vector<1x1x128xf32> to vector<1x128xf32>
    %44 = vector.broadcast %43 : vector<1x128xf32> to vector<16x128xf32>
    %45 = arith.mulf %12, %44 : vector<16x128xf32>
    %46 = arith.addf %41, %45 : vector<16x128xf32>
    %47 = arith.addf %32, %46 : vector<16x128xf32>
    %c0_22 = arith.constant 0 : index
    %c2 = arith.constant 2 : index
    %c0_23 = arith.constant 0 : index
    %48 = vector.load %arg3[%c0_22, %c2, %c0_23] : memref<4x25x128xf32, #tpu.memory_space<vmem>>, vector<1x1x128xf32>
    %49 = vector.shape_cast %48 : vector<1x1x128xf32> to vector<1x128xf32>
    %50 = vector.broadcast %49 : vector<1x128xf32> to vector<16x128xf32>
    %51 = arith.mulf %7, %50 : vector<16x128xf32>
    %c0_24 = arith.constant 0 : index
    %c5 = arith.constant 5 : index
    %c0_25 = arith.constant 0 : index
    %52 = vector.load %arg3[%c0_24, %c5, %c0_25] : memref<4x25x128xf32, #tpu.memory_space<vmem>>, vector<1x1x128xf32>
    %53 = vector.shape_cast %52 : vector<1x1x128xf32> to vector<1x128xf32>
    %54 = vector.broadcast %53 : vector<1x128xf32> to vector<16x128xf32>
    %55 = arith.mulf %2, %54 : vector<16x128xf32>
    %56 = arith.addf %51, %55 : vector<16x128xf32>
    %c0_26 = arith.constant 0 : index
    %c8 = arith.constant 8 : index
    %c0_27 = arith.constant 0 : index
    %57 = vector.load %arg3[%c0_26, %c8, %c0_27] : memref<4x25x128xf32, #tpu.memory_space<vmem>>, vector<1x1x128xf32>
    %58 = vector.shape_cast %57 : vector<1x1x128xf32> to vector<1x128xf32>
    %59 = vector.broadcast %58 : vector<1x128xf32> to vector<16x128xf32>
    %60 = arith.mulf %12, %59 : vector<16x128xf32>
    %61 = arith.addf %56, %60 : vector<16x128xf32>
    %c120_i32 = arith.constant 120 : i32
    %62 = tpu.dynamic_rotate %61 by %c120_i32 dim 1 : vector<16x128xf32>, i32 -> vector<16x128xf32>
    %63 = arith.addf %47, %62 : vector<16x128xf32>
    %c0_28 = arith.constant 0 : index
    %c0_29 = arith.constant 0 : index
    %c0_30 = arith.constant 0 : index
    %c0_31 = arith.constant 0 : index
    %64 = vector.load %arg2[%c0_28, %c0_29, %c0_30, %c0_31] : memref<1x4x16x128xf32, #tpu.memory_space<vmem>>, vector<1x1x16x128xf32>
    %65 = vector.shape_cast %64 : vector<1x1x16x128xf32> to vector<16x128xf32>
    %66 = arith.mulf %63, %65 : vector<16x128xf32>
    %c0_32 = arith.constant 0 : index
    %c0_33 = arith.constant 0 : index
    %c0_34 = arith.constant 0 : index
    %c0_35 = arith.constant 0 : index
    %67 = vector.load %arg5[%c0_32, %c0_33, %c0_34, %c0_35] : memref<1x4x16x128xf32, #tpu.memory_space<vmem>>, vector<1x1x16x128xf32>
    %68 = vector.shape_cast %67 : vector<1x1x16x128xf32> to vector<16x128xf32>
    %69 = vector.shape_cast %66 : vector<16x128xf32> to vector<1x1x16x128xf32>
    tpu.vector_store %arg5[%c0_32, %c0_33, %c0_34, %c0_35], %69 {strides = array<i32>} : memref<1x4x16x128xf32, #tpu.memory_space<vmem>>, vector<1x1x16x128xf32>,
    %c0_36 = arith.constant 0 : index
    %c1_37 = arith.constant 1 : index
    %c0_38 = arith.constant 0 : index
    %c0_39 = arith.constant 0 : index
    %70 = vector.load %arg1[%c0_36, %c1_37, %c0_38, %c0_39] : memref<1x4x16x128xf32, #tpu.memory_space<vmem>>, vector<1x1x16x128xf32>
    %71 = vector.shape_cast %70 : vector<1x1x16x128xf32> to vector<16x128xf32>
    %c1_i32_40 = arith.constant 1 : i32
    %72 = tpu.dynamic_rotate %71 by %c1_i32_40 dim 0 : vector<16x128xf32>, i32 -> vector<16x128xf32>
    %c1_i32_41 = arith.constant 1 : i32
    %73 = vector.broadcast %c1_i32_41 : i32 to vector<16x128xi32>
    %74 = arith.cmpi sge, %0, %73 : vector<16x128xi32>
    %cst_42 = arith.constant 0.000000e+00 : f32
    %75 = vector.broadcast %cst_42 : f32 to vector<16x128xf32>
    %76 = arith.select %74, %72, %75 : vector<16x128xi1>, vector<16x128xf32>
    %c15_i32_43 = arith.constant 15 : i32
    %77 = tpu.dynamic_rotate %71 by %c15_i32_43 dim 0 : vector<16x128xf32>, i32 -> vector<16x128xf32>
    %c15_i32_44 = arith.constant 15 : i32
    %78 = vector.broadcast %c15_i32_44 : i32 to vector<16x128xi32>
    %79 = arith.cmpi slt, %0, %78 : vector<16x128xi32>
    %cst_45 = arith.constant 0.000000e+00 : f32
    %80 = vector.broadcast %cst_45 : f32 to vector<16x128xf32>
    %81 = arith.select %79, %77, %80 : vector<16x128xi1>, vector<16x128xf32>
    %c1_46 = arith.constant 1 : index
    %c0_47 = arith.constant 0 : index
    %c0_48 = arith.constant 0 : index
    %82 = vector.load %arg4[%c1_46, %c0_47, %c0_48] : memref<4x1x128xf32, #tpu.memory_space<vmem>>, vector<1x1x128xf32>
    %83 = vector.shape_cast %82 : vector<1x1x128xf32> to vector<1x128xf32>
    %84 = vector.shape_cast %83 : vector<1x128xf32> to vector<1x128xf32>
    %85 = vector.broadcast %84 : vector<1x128xf32> to vector<16x128xf32>
    %c1_49 = arith.constant 1 : index
    %c0_50 = arith.constant 0 : index
    %c0_51 = arith.constant 0 : index
    %86 = vector.load %arg3[%c1_49, %c0_50, %c0_51] : memref<4x25x128xf32, #tpu.memory_space<vmem>>, vector<1x1x128xf32>
    %87 = vector.shape_cast %86 : vector<1x1x128xf32> to vector<1x128xf32>
    %88 = vector.broadcast %87 : vector<1x128xf32> to vector<16x128xf32>
    %89 = arith.mulf %76, %88 : vector<16x128xf32>
    %c1_52 = arith.constant 1 : index
    %c3_53 = arith.constant 3 : index
    %c0_54 = arith.constant 0 : index
    %90 = vector.load %arg3[%c1_52, %c3_53, %c0_54] : memref<4x25x128xf32, #tpu.memory_space<vmem>>, vector<1x1x128xf32>
    %91 = vector.shape_cast %90 : vector<1x1x128xf32> to vector<1x128xf32>
    %92 = vector.broadcast %91 : vector<1x128xf32> to vector<16x128xf32>
    %93 = arith.mulf %71, %92 : vector<16x128xf32>
    %94 = arith.addf %89, %93 : vector<16x128xf32>
    %c1_55 = arith.constant 1 : index
    %c6_56 = arith.constant 6 : index
    %c0_57 = arith.constant 0 : index
    %95 = vector.load %arg3[%c1_55, %c6_56, %c0_57] : memref<4x25x128xf32, #tpu.memory_space<vmem>>, vector<1x1x128xf32>
    %96 = vector.shape_cast %95 : vector<1x1x128xf32> to vector<1x128xf32>
    %97 = vector.broadcast %96 : vector<1x128xf32> to vector<16x128xf32>
    %98 = arith.mulf %81, %97 : vector<16x128xf32>
    %99 = arith.addf %94, %98 : vector<16x128xf32>
    %c8_i32_58 = arith.constant 8 : i32
    %100 = tpu.dynamic_rotate %99 by %c8_i32_58 dim 1 : vector<16x128xf32>, i32 -> vector<16x128xf32>
    %101 = arith.addf %85, %100 : vector<16x128xf32>
    %c1_59 = arith.constant 1 : index
    %c1_60 = arith.constant 1 : index
    %c0_61 = arith.constant 0 : index
    %102 = vector.load %arg3[%c1_59, %c1_60, %c0_61] : memref<4x25x128xf32, #tpu.memory_space<vmem>>, vector<1x1x128xf32>
    %103 = vector.shape_cast %102 : vector<1x1x128xf32> to vector<1x128xf32>
    %104 = vector.broadcast %103 : vector<1x128xf32> to vector<16x128xf32>
    %105 = arith.mulf %76, %104 : vector<16x128xf32>
    %c1_62 = arith.constant 1 : index
    %c4_63 = arith.constant 4 : index
    %c0_64 = arith.constant 0 : index
    %106 = vector.load %arg3[%c1_62, %c4_63, %c0_64] : memref<4x25x128xf32, #tpu.memory_space<vmem>>, vector<1x1x128xf32>
    %107 = vector.shape_cast %106 : vector<1x1x128xf32> to vector<1x128xf32>
    %108 = vector.broadcast %107 : vector<1x128xf32> to vector<16x128xf32>
    %109 = arith.mulf %71, %108 : vector<16x128xf32>
    %110 = arith.addf %105, %109 : vector<16x128xf32>
    %c1_65 = arith.constant 1 : index
    %c7_66 = arith.constant 7 : index
    %c0_67 = arith.constant 0 : index
    %111 = vector.load %arg3[%c1_65, %c7_66, %c0_67] : memref<4x25x128xf32, #tpu.memory_space<vmem>>, vector<1x1x128xf32>
    %112 = vector.shape_cast %111 : vector<1x1x128xf32> to vector<1x128xf32>
    %113 = vector.broadcast %112 : vector<1x128xf32> to vector<16x128xf32>
    %114 = arith.mulf %81, %113 : vector<16x128xf32>
    %115 = arith.addf %110, %114 : vector<16x128xf32>
    %116 = arith.addf %101, %115 : vector<16x128xf32>
    %c1_68 = arith.constant 1 : index
    %c2_69 = arith.constant 2 : index
    %c0_70 = arith.constant 0 : index
    %117 = vector.load %arg3[%c1_68, %c2_69, %c0_70] : memref<4x25x128xf32, #tpu.memory_space<vmem>>, vector<1x1x128xf32>
    %118 = vector.shape_cast %117 : vector<1x1x128xf32> to vector<1x128xf32>
    %119 = vector.broadcast %118 : vector<1x128xf32> to vector<16x128xf32>
    %120 = arith.mulf %76, %119 : vector<16x128xf32>
    %c1_71 = arith.constant 1 : index
    %c5_72 = arith.constant 5 : index
    %c0_73 = arith.constant 0 : index
    %121 = vector.load %arg3[%c1_71, %c5_72, %c0_73] : memref<4x25x128xf32, #tpu.memory_space<vmem>>, vector<1x1x128xf32>
    %122 = vector.shape_cast %121 : vector<1x1x128xf32> to vector<1x128xf32>
    %123 = vector.broadcast %122 : vector<1x128xf32> to vector<16x128xf32>
    %124 = arith.mulf %71, %123 : vector<16x128xf32>
    %125 = arith.addf %120, %124 : vector<16x128xf32>
    %c1_74 = arith.constant 1 : index
    %c8_75 = arith.constant 8 : index
    %c0_76 = arith.constant 0 : index
    %126 = vector.load %arg3[%c1_74, %c8_75, %c0_76] : memref<4x25x128xf32, #tpu.memory_space<vmem>>, vector<1x1x128xf32>
    %127 = vector.shape_cast %126 : vector<1x1x128xf32> to vector<1x128xf32>
    %128 = vector.broadcast %127 : vector<1x128xf32> to vector<16x128xf32>
    %129 = arith.mulf %81, %128 : vector<16x128xf32>
    %130 = arith.addf %125, %129 : vector<16x128xf32>
    %c120_i32_77 = arith.constant 120 : i32
    %131 = tpu.dynamic_rotate %130 by %c120_i32_77 dim 1 : vector<16x128xf32>, i32 -> vector<16x128xf32>
    %132 = arith.addf %116, %131 : vector<16x128xf32>
    %c0_78 = arith.constant 0 : index
    %c1_79 = arith.constant 1 : index
    %c0_80 = arith.constant 0 : index
    %c0_81 = arith.constant 0 : index
    %133 = vector.load %arg2[%c0_78, %c1_79, %c0_80, %c0_81] : memref<1x4x16x128xf32, #tpu.memory_space<vmem>>, vector<1x1x16x128xf32>
    %134 = vector.shape_cast %133 : vector<1x1x16x128xf32> to vector<16x128xf32>
    %135 = arith.mulf %132, %134 : vector<16x128xf32>
    %c0_82 = arith.constant 0 : index
    %c1_83 = arith.constant 1 : index
    %c0_84 = arith.constant 0 : index
    %c0_85 = arith.constant 0 : index
    %136 = vector.load %arg5[%c0_82, %c1_83, %c0_84, %c0_85] : memref<1x4x16x128xf32, #tpu.memory_space<vmem>>, vector<1x1x16x128xf32>
    %137 = vector.shape_cast %136 : vector<1x1x16x128xf32> to vector<16x128xf32>
    %138 = vector.shape_cast %135 : vector<16x128xf32> to vector<1x1x16x128xf32>
    tpu.vector_store %arg5[%c0_82, %c1_83, %c0_84, %c0_85], %138 {strides = array<i32>} : memref<1x4x16x128xf32, #tpu.memory_space<vmem>>, vector<1x1x16x128xf32>,
    %c0_86 = arith.constant 0 : index
    %c2_87 = arith.constant 2 : index
    %c0_88 = arith.constant 0 : index
    %c0_89 = arith.constant 0 : index
    %139 = vector.load %arg1[%c0_86, %c2_87, %c0_88, %c0_89] : memref<1x4x16x128xf32, #tpu.memory_space<vmem>>, vector<1x1x16x128xf32>
    %140 = vector.shape_cast %139 : vector<1x1x16x128xf32> to vector<16x128xf32>
    %c2_i32 = arith.constant 2 : i32
    %141 = tpu.dynamic_rotate %140 by %c2_i32 dim 0 : vector<16x128xf32>, i32 -> vector<16x128xf32>
    %c2_i32_90 = arith.constant 2 : i32
    %142 = vector.broadcast %c2_i32_90 : i32 to vector<16x128xi32>
    %143 = arith.cmpi sge, %0, %142 : vector<16x128xi32>
    %cst_91 = arith.constant 0.000000e+00 : f32
    %144 = vector.broadcast %cst_91 : f32 to vector<16x128xf32>
    %145 = arith.select %143, %141, %144 : vector<16x128xi1>, vector<16x128xf32>
    %c1_i32_92 = arith.constant 1 : i32
    %146 = tpu.dynamic_rotate %140 by %c1_i32_92 dim 0 : vector<16x128xf32>, i32 -> vector<16x128xf32>
    %c1_i32_93 = arith.constant 1 : i32
    %147 = vector.broadcast %c1_i32_93 : i32 to vector<16x128xi32>
    %148 = arith.cmpi sge, %0, %147 : vector<16x128xi32>
    %cst_94 = arith.constant 0.000000e+00 : f32
    %149 = vector.broadcast %cst_94 : f32 to vector<16x128xf32>
    %150 = arith.select %148, %146, %149 : vector<16x128xi1>, vector<16x128xf32>
    %c15_i32_95 = arith.constant 15 : i32
    %151 = tpu.dynamic_rotate %140 by %c15_i32_95 dim 0 : vector<16x128xf32>, i32 -> vector<16x128xf32>
    %c15_i32_96 = arith.constant 15 : i32
    %152 = vector.broadcast %c15_i32_96 : i32 to vector<16x128xi32>
    %153 = arith.cmpi slt, %0, %152 : vector<16x128xi32>
    %cst_97 = arith.constant 0.000000e+00 : f32
    %154 = vector.broadcast %cst_97 : f32 to vector<16x128xf32>
    %155 = arith.select %153, %151, %154 : vector<16x128xi1>, vector<16x128xf32>
    %c14_i32 = arith.constant 14 : i32
    %156 = tpu.dynamic_rotate %140 by %c14_i32 dim 0 : vector<16x128xf32>, i32 -> vector<16x128xf32>
    %c14_i32_98 = arith.constant 14 : i32
    %157 = vector.broadcast %c14_i32_98 : i32 to vector<16x128xi32>
    %158 = arith.cmpi slt, %0, %157 : vector<16x128xi32>
    %cst_99 = arith.constant 0.000000e+00 : f32
    %159 = vector.broadcast %cst_99 : f32 to vector<16x128xf32>
    %160 = arith.select %158, %156, %159 : vector<16x128xi1>, vector<16x128xf32>
    %c2_100 = arith.constant 2 : index
    %c0_101 = arith.constant 0 : index
    %c0_102 = arith.constant 0 : index
    %161 = vector.load %arg4[%c2_100, %c0_101, %c0_102] : memref<4x1x128xf32, #tpu.memory_space<vmem>>, vector<1x1x128xf32>
    %162 = vector.shape_cast %161 : vector<1x1x128xf32> to vector<1x128xf32>
    %163 = vector.shape_cast %162 : vector<1x128xf32> to vector<1x128xf32>
    %164 = vector.broadcast %163 : vector<1x128xf32> to vector<16x128xf32>
    %c2_103 = arith.constant 2 : index
    %c0_104 = arith.constant 0 : index
    %c0_105 = arith.constant 0 : index
    %165 = vector.load %arg3[%c2_103, %c0_104, %c0_105] : memref<4x25x128xf32, #tpu.memory_space<vmem>>, vector<1x1x128xf32>
    %166 = vector.shape_cast %165 : vector<1x1x128xf32> to vector<1x128xf32>
    %167 = vector.broadcast %166 : vector<1x128xf32> to vector<16x128xf32>
    %168 = arith.mulf %145, %167 : vector<16x128xf32>
    %c2_106 = arith.constant 2 : index
    %c5_107 = arith.constant 5 : index
    %c0_108 = arith.constant 0 : index
    %169 = vector.load %arg3[%c2_106, %c5_107, %c0_108] : memref<4x25x128xf32, #tpu.memory_space<vmem>>, vector<1x1x128xf32>
    %170 = vector.shape_cast %169 : vector<1x1x128xf32> to vector<1x128xf32>
    %171 = vector.broadcast %170 : vector<1x128xf32> to vector<16x128xf32>
    %172 = arith.mulf %150, %171 : vector<16x128xf32>
    %173 = arith.addf %168, %172 : vector<16x128xf32>
    %c2_109 = arith.constant 2 : index
    %c10 = arith.constant 10 : index
    %c0_110 = arith.constant 0 : index
    %174 = vector.load %arg3[%c2_109, %c10, %c0_110] : memref<4x25x128xf32, #tpu.memory_space<vmem>>, vector<1x1x128xf32>
    %175 = vector.shape_cast %174 : vector<1x1x128xf32> to vector<1x128xf32>
    %176 = vector.broadcast %175 : vector<1x128xf32> to vector<16x128xf32>
    %177 = arith.mulf %140, %176 : vector<16x128xf32>
    %178 = arith.addf %173, %177 : vector<16x128xf32>
    %c2_111 = arith.constant 2 : index
    %c15 = arith.constant 15 : index
    %c0_112 = arith.constant 0 : index
    %179 = vector.load %arg3[%c2_111, %c15, %c0_112] : memref<4x25x128xf32, #tpu.memory_space<vmem>>, vector<1x1x128xf32>
    %180 = vector.shape_cast %179 : vector<1x1x128xf32> to vector<1x128xf32>
    %181 = vector.broadcast %180 : vector<1x128xf32> to vector<16x128xf32>
    %182 = arith.mulf %155, %181 : vector<16x128xf32>
    %183 = arith.addf %178, %182 : vector<16x128xf32>
    %c2_113 = arith.constant 2 : index
    %c20 = arith.constant 20 : index
    %c0_114 = arith.constant 0 : index
    %184 = vector.load %arg3[%c2_113, %c20, %c0_114] : memref<4x25x128xf32, #tpu.memory_space<vmem>>, vector<1x1x128xf32>
    %185 = vector.shape_cast %184 : vector<1x1x128xf32> to vector<1x128xf32>
    %186 = vector.broadcast %185 : vector<1x128xf32> to vector<16x128xf32>
    %187 = arith.mulf %160, %186 : vector<16x128xf32>
    %188 = arith.addf %183, %187 : vector<16x128xf32>
    %c16_i32 = arith.constant 16 : i32
    %189 = tpu.dynamic_rotate %188 by %c16_i32 dim 1 : vector<16x128xf32>, i32 -> vector<16x128xf32>
    %190 = arith.addf %164, %189 : vector<16x128xf32>
    %c2_115 = arith.constant 2 : index
    %c1_116 = arith.constant 1 : index
    %c0_117 = arith.constant 0 : index
    %191 = vector.load %arg3[%c2_115, %c1_116, %c0_117] : memref<4x25x128xf32, #tpu.memory_space<vmem>>, vector<1x1x128xf32>
    %192 = vector.shape_cast %191 : vector<1x1x128xf32> to vector<1x128xf32>
    %193 = vector.broadcast %192 : vector<1x128xf32> to vector<16x128xf32>
    %194 = arith.mulf %145, %193 : vector<16x128xf32>
    %c2_118 = arith.constant 2 : index
    %c6_119 = arith.constant 6 : index
    %c0_120 = arith.constant 0 : index
    %195 = vector.load %arg3[%c2_118, %c6_119, %c0_120] : memref<4x25x128xf32, #tpu.memory_space<vmem>>, vector<1x1x128xf32>
    %196 = vector.shape_cast %195 : vector<1x1x128xf32> to vector<1x128xf32>
    %197 = vector.broadcast %196 : vector<1x128xf32> to vector<16x128xf32>
    %198 = arith.mulf %150, %197 : vector<16x128xf32>
    %199 = arith.addf %194, %198 : vector<16x128xf32>
    %c2_121 = arith.constant 2 : index
    %c11 = arith.constant 11 : index
    %c0_122 = arith.constant 0 : index
    %200 = vector.load %arg3[%c2_121, %c11, %c0_122] : memref<4x25x128xf32, #tpu.memory_space<vmem>>, vector<1x1x128xf32>
    %201 = vector.shape_cast %200 : vector<1x1x128xf32> to vector<1x128xf32>
    %202 = vector.broadcast %201 : vector<1x128xf32> to vector<16x128xf32>
    %203 = arith.mulf %140, %202 : vector<16x128xf32>
    %204 = arith.addf %199, %203 : vector<16x128xf32>
    %c2_123 = arith.constant 2 : index
    %c16 = arith.constant 16 : index
    %c0_124 = arith.constant 0 : index
    %205 = vector.load %arg3[%c2_123, %c16, %c0_124] : memref<4x25x128xf32, #tpu.memory_space<vmem>>, vector<1x1x128xf32>
    %206 = vector.shape_cast %205 : vector<1x1x128xf32> to vector<1x128xf32>
    %207 = vector.broadcast %206 : vector<1x128xf32> to vector<16x128xf32>
    %208 = arith.mulf %155, %207 : vector<16x128xf32>
    %209 = arith.addf %204, %208 : vector<16x128xf32>
    %c2_125 = arith.constant 2 : index
    %c21 = arith.constant 21 : index
    %c0_126 = arith.constant 0 : index
    %210 = vector.load %arg3[%c2_125, %c21, %c0_126] : memref<4x25x128xf32, #tpu.memory_space<vmem>>, vector<1x1x128xf32>
    %211 = vector.shape_cast %210 : vector<1x1x128xf32> to vector<1x128xf32>
    %212 = vector.broadcast %211 : vector<1x128xf32> to vector<16x128xf32>
    %213 = arith.mulf %160, %212 : vector<16x128xf32>
    %214 = arith.addf %209, %213 : vector<16x128xf32>
    %c8_i32_127 = arith.constant 8 : i32
    %215 = tpu.dynamic_rotate %214 by %c8_i32_127 dim 1 : vector<16x128xf32>, i32 -> vector<16x128xf32>
    %216 = arith.addf %190, %215 : vector<16x128xf32>
    %c2_128 = arith.constant 2 : index
    %c2_129 = arith.constant 2 : index
    %c0_130 = arith.constant 0 : index
    %217 = vector.load %arg3[%c2_128, %c2_129, %c0_130] : memref<4x25x128xf32, #tpu.memory_space<vmem>>, vector<1x1x128xf32>
    %218 = vector.shape_cast %217 : vector<1x1x128xf32> to vector<1x128xf32>
    %219 = vector.broadcast %218 : vector<1x128xf32> to vector<16x128xf32>
    %220 = arith.mulf %145, %219 : vector<16x128xf32>
    %c2_131 = arith.constant 2 : index
    %c7_132 = arith.constant 7 : index
    %c0_133 = arith.constant 0 : index
    %221 = vector.load %arg3[%c2_131, %c7_132, %c0_133] : memref<4x25x128xf32, #tpu.memory_space<vmem>>, vector<1x1x128xf32>
    %222 = vector.shape_cast %221 : vector<1x1x128xf32> to vector<1x128xf32>
    %223 = vector.broadcast %222 : vector<1x128xf32> to vector<16x128xf32>
    %224 = arith.mulf %150, %223 : vector<16x128xf32>
    %225 = arith.addf %220, %224 : vector<16x128xf32>
    %c2_134 = arith.constant 2 : index
    %c12 = arith.constant 12 : index
    %c0_135 = arith.constant 0 : index
    %226 = vector.load %arg3[%c2_134, %c12, %c0_135] : memref<4x25x128xf32, #tpu.memory_space<vmem>>, vector<1x1x128xf32>
    %227 = vector.shape_cast %226 : vector<1x1x128xf32> to vector<1x128xf32>
    %228 = vector.broadcast %227 : vector<1x128xf32> to vector<16x128xf32>
    %229 = arith.mulf %140, %228 : vector<16x128xf32>
    %230 = arith.addf %225, %229 : vector<16x128xf32>
    %c2_136 = arith.constant 2 : index
    %c17 = arith.constant 17 : index
    %c0_137 = arith.constant 0 : index
    %231 = vector.load %arg3[%c2_136, %c17, %c0_137] : memref<4x25x128xf32, #tpu.memory_space<vmem>>, vector<1x1x128xf32>
    %232 = vector.shape_cast %231 : vector<1x1x128xf32> to vector<1x128xf32>
    %233 = vector.broadcast %232 : vector<1x128xf32> to vector<16x128xf32>
    %234 = arith.mulf %155, %233 : vector<16x128xf32>
    %235 = arith.addf %230, %234 : vector<16x128xf32>
    %c2_138 = arith.constant 2 : index
    %c22 = arith.constant 22 : index
    %c0_139 = arith.constant 0 : index
    %236 = vector.load %arg3[%c2_138, %c22, %c0_139] : memref<4x25x128xf32, #tpu.memory_space<vmem>>, vector<1x1x128xf32>
    %237 = vector.shape_cast %236 : vector<1x1x128xf32> to vector<1x128xf32>
    %238 = vector.broadcast %237 : vector<1x128xf32> to vector<16x128xf32>
    %239 = arith.mulf %160, %238 : vector<16x128xf32>
    %240 = arith.addf %235, %239 : vector<16x128xf32>
    %241 = arith.addf %216, %240 : vector<16x128xf32>
    %c2_140 = arith.constant 2 : index
    %c3_141 = arith.constant 3 : index
    %c0_142 = arith.constant 0 : index
    %242 = vector.load %arg3[%c2_140, %c3_141, %c0_142] : memref<4x25x128xf32, #tpu.memory_space<vmem>>, vector<1x1x128xf32>
    %243 = vector.shape_cast %242 : vector<1x1x128xf32> to vector<1x128xf32>
    %244 = vector.broadcast %243 : vector<1x128xf32> to vector<16x128xf32>
    %245 = arith.mulf %145, %244 : vector<16x128xf32>
    %c2_143 = arith.constant 2 : index
    %c8_144 = arith.constant 8 : index
    %c0_145 = arith.constant 0 : index
    %246 = vector.load %arg3[%c2_143, %c8_144, %c0_145] : memref<4x25x128xf32, #tpu.memory_space<vmem>>, vector<1x1x128xf32>
    %247 = vector.shape_cast %246 : vector<1x1x128xf32> to vector<1x128xf32>
    %248 = vector.broadcast %247 : vector<1x128xf32> to vector<16x128xf32>
    %249 = arith.mulf %150, %248 : vector<16x128xf32>
    %250 = arith.addf %245, %249 : vector<16x128xf32>
    %c2_146 = arith.constant 2 : index
    %c13 = arith.constant 13 : index
    %c0_147 = arith.constant 0 : index
    %251 = vector.load %arg3[%c2_146, %c13, %c0_147] : memref<4x25x128xf32, #tpu.memory_space<vmem>>, vector<1x1x128xf32>
    %252 = vector.shape_cast %251 : vector<1x1x128xf32> to vector<1x128xf32>
    %253 = vector.broadcast %252 : vector<1x128xf32> to vector<16x128xf32>
    %254 = arith.mulf %140, %253 : vector<16x128xf32>
    %255 = arith.addf %250, %254 : vector<16x128xf32>
    %c2_148 = arith.constant 2 : index
    %c18 = arith.constant 18 : index
    %c0_149 = arith.constant 0 : index
    %256 = vector.load %arg3[%c2_148, %c18, %c0_149] : memref<4x25x128xf32, #tpu.memory_space<vmem>>, vector<1x1x128xf32>
    %257 = vector.shape_cast %256 : vector<1x1x128xf32> to vector<1x128xf32>
    %258 = vector.broadcast %257 : vector<1x128xf32> to vector<16x128xf32>
    %259 = arith.mulf %155, %258 : vector<16x128xf32>
    %260 = arith.addf %255, %259 : vector<16x128xf32>
    %c2_150 = arith.constant 2 : index
    %c23 = arith.constant 23 : index
    %c0_151 = arith.constant 0 : index
    %261 = vector.load %arg3[%c2_150, %c23, %c0_151] : memref<4x25x128xf32, #tpu.memory_space<vmem>>, vector<1x1x128xf32>
    %262 = vector.shape_cast %261 : vector<1x1x128xf32> to vector<1x128xf32>
    %263 = vector.broadcast %262 : vector<1x128xf32> to vector<16x128xf32>
    %264 = arith.mulf %160, %263 : vector<16x128xf32>
    %265 = arith.addf %260, %264 : vector<16x128xf32>
    %c120_i32_152 = arith.constant 120 : i32
    %266 = tpu.dynamic_rotate %265 by %c120_i32_152 dim 1 : vector<16x128xf32>, i32 -> vector<16x128xf32>
    %267 = arith.addf %241, %266 : vector<16x128xf32>
    %c2_153 = arith.constant 2 : index
    %c4_154 = arith.constant 4 : index
    %c0_155 = arith.constant 0 : index
    %268 = vector.load %arg3[%c2_153, %c4_154, %c0_155] : memref<4x25x128xf32, #tpu.memory_space<vmem>>, vector<1x1x128xf32>
    %269 = vector.shape_cast %268 : vector<1x1x128xf32> to vector<1x128xf32>
    %270 = vector.broadcast %269 : vector<1x128xf32> to vector<16x128xf32>
    %271 = arith.mulf %145, %270 : vector<16x128xf32>
    %c2_156 = arith.constant 2 : index
    %c9 = arith.constant 9 : index
    %c0_157 = arith.constant 0 : index
    %272 = vector.load %arg3[%c2_156, %c9, %c0_157] : memref<4x25x128xf32, #tpu.memory_space<vmem>>, vector<1x1x128xf32>
    %273 = vector.shape_cast %272 : vector<1x1x128xf32> to vector<1x128xf32>
    %274 = vector.broadcast %273 : vector<1x128xf32> to vector<16x128xf32>
    %275 = arith.mulf %150, %274 : vector<16x128xf32>
    %276 = arith.addf %271, %275 : vector<16x128xf32>
    %c2_158 = arith.constant 2 : index
    %c14 = arith.constant 14 : index
    %c0_159 = arith.constant 0 : index
    %277 = vector.load %arg3[%c2_158, %c14, %c0_159] : memref<4x25x128xf32, #tpu.memory_space<vmem>>, vector<1x1x128xf32>
    %278 = vector.shape_cast %277 : vector<1x1x128xf32> to vector<1x128xf32>
    %279 = vector.broadcast %278 : vector<1x128xf32> to vector<16x128xf32>
    %280 = arith.mulf %140, %279 : vector<16x128xf32>
    %281 = arith.addf %276, %280 : vector<16x128xf32>
    %c2_160 = arith.constant 2 : index
    %c19 = arith.constant 19 : index
    %c0_161 = arith.constant 0 : index
    %282 = vector.load %arg3[%c2_160, %c19, %c0_161] : memref<4x25x128xf32, #tpu.memory_space<vmem>>, vector<1x1x128xf32>
    %283 = vector.shape_cast %282 : vector<1x1x128xf32> to vector<1x128xf32>
    %284 = vector.broadcast %283 : vector<1x128xf32> to vector<16x128xf32>
    %285 = arith.mulf %155, %284 : vector<16x128xf32>
    %286 = arith.addf %281, %285 : vector<16x128xf32>
    %c2_162 = arith.constant 2 : index
    %c24 = arith.constant 24 : index
    %c0_163 = arith.constant 0 : index
    %287 = vector.load %arg3[%c2_162, %c24, %c0_163] : memref<4x25x128xf32, #tpu.memory_space<vmem>>, vector<1x1x128xf32>
    %288 = vector.shape_cast %287 : vector<1x1x128xf32> to vector<1x128xf32>
    %289 = vector.broadcast %288 : vector<1x128xf32> to vector<16x128xf32>
    %290 = arith.mulf %160, %289 : vector<16x128xf32>
    %291 = arith.addf %286, %290 : vector<16x128xf32>
    %c112_i32 = arith.constant 112 : i32
    %292 = tpu.dynamic_rotate %291 by %c112_i32 dim 1 : vector<16x128xf32>, i32 -> vector<16x128xf32>
    %293 = arith.addf %267, %292 : vector<16x128xf32>
    %c0_164 = arith.constant 0 : index
    %c2_165 = arith.constant 2 : index
    %c0_166 = arith.constant 0 : index
    %c0_167 = arith.constant 0 : index
    %294 = vector.load %arg2[%c0_164, %c2_165, %c0_166, %c0_167] : memref<1x4x16x128xf32, #tpu.memory_space<vmem>>, vector<1x1x16x128xf32>
    %295 = vector.shape_cast %294 : vector<1x1x16x128xf32> to vector<16x128xf32>
    %296 = arith.mulf %293, %295 : vector<16x128xf32>
    %c0_168 = arith.constant 0 : index
    %c2_169 = arith.constant 2 : index
    %c0_170 = arith.constant 0 : index
    %c0_171 = arith.constant 0 : index
    %297 = vector.load %arg5[%c0_168, %c2_169, %c0_170, %c0_171] : memref<1x4x16x128xf32, #tpu.memory_space<vmem>>, vector<1x1x16x128xf32>
    %298 = vector.shape_cast %297 : vector<1x1x16x128xf32> to vector<16x128xf32>
    %299 = vector.shape_cast %296 : vector<16x128xf32> to vector<1x1x16x128xf32>
    tpu.vector_store %arg5[%c0_168, %c2_169, %c0_170, %c0_171], %299 {strides = array<i32>} : memref<1x4x16x128xf32, #tpu.memory_space<vmem>>, vector<1x1x16x128xf32>,
    %c0_172 = arith.constant 0 : index
    %c3_173 = arith.constant 3 : index
    %c0_174 = arith.constant 0 : index
    %c0_175 = arith.constant 0 : index
    %300 = vector.load %arg1[%c0_172, %c3_173, %c0_174, %c0_175] : memref<1x4x16x128xf32, #tpu.memory_space<vmem>>, vector<1x1x16x128xf32>
    %301 = vector.shape_cast %300 : vector<1x1x16x128xf32> to vector<16x128xf32>
    %c2_i32_176 = arith.constant 2 : i32
    %302 = tpu.dynamic_rotate %301 by %c2_i32_176 dim 0 : vector<16x128xf32>, i32 -> vector<16x128xf32>
    %c2_i32_177 = arith.constant 2 : i32
    %303 = vector.broadcast %c2_i32_177 : i32 to vector<16x128xi32>
    %304 = arith.cmpi sge, %0, %303 : vector<16x128xi32>
    %cst_178 = arith.constant 0.000000e+00 : f32
    %305 = vector.broadcast %cst_178 : f32 to vector<16x128xf32>
    %306 = arith.select %304, %302, %305 : vector<16x128xi1>, vector<16x128xf32>
    %c1_i32_179 = arith.constant 1 : i32
    %307 = tpu.dynamic_rotate %301 by %c1_i32_179 dim 0 : vector<16x128xf32>, i32 -> vector<16x128xf32>
    %c1_i32_180 = arith.constant 1 : i32
    %308 = vector.broadcast %c1_i32_180 : i32 to vector<16x128xi32>
    %309 = arith.cmpi sge, %0, %308 : vector<16x128xi32>
    %cst_181 = arith.constant 0.000000e+00 : f32
    %310 = vector.broadcast %cst_181 : f32 to vector<16x128xf32>
    %311 = arith.select %309, %307, %310 : vector<16x128xi1>, vector<16x128xf32>
    %c15_i32_182 = arith.constant 15 : i32
    %312 = tpu.dynamic_rotate %301 by %c15_i32_182 dim 0 : vector<16x128xf32>, i32 -> vector<16x128xf32>
    %c15_i32_183 = arith.constant 15 : i32
    %313 = vector.broadcast %c15_i32_183 : i32 to vector<16x128xi32>
    %314 = arith.cmpi slt, %0, %313 : vector<16x128xi32>
    %cst_184 = arith.constant 0.000000e+00 : f32
    %315 = vector.broadcast %cst_184 : f32 to vector<16x128xf32>
    %316 = arith.select %314, %312, %315 : vector<16x128xi1>, vector<16x128xf32>
    %c14_i32_185 = arith.constant 14 : i32
    %317 = tpu.dynamic_rotate %301 by %c14_i32_185 dim 0 : vector<16x128xf32>, i32 -> vector<16x128xf32>
    %c14_i32_186 = arith.constant 14 : i32
    %318 = vector.broadcast %c14_i32_186 : i32 to vector<16x128xi32>
    %319 = arith.cmpi slt, %0, %318 : vector<16x128xi32>
    %cst_187 = arith.constant 0.000000e+00 : f32
    %320 = vector.broadcast %cst_187 : f32 to vector<16x128xf32>
    %321 = arith.select %319, %317, %320 : vector<16x128xi1>, vector<16x128xf32>
    %c3_188 = arith.constant 3 : index
    %c0_189 = arith.constant 0 : index
    %c0_190 = arith.constant 0 : index
    %322 = vector.load %arg4[%c3_188, %c0_189, %c0_190] : memref<4x1x128xf32, #tpu.memory_space<vmem>>, vector<1x1x128xf32>
    %323 = vector.shape_cast %322 : vector<1x1x128xf32> to vector<1x128xf32>
    %324 = vector.shape_cast %323 : vector<1x128xf32> to vector<1x128xf32>
    %325 = vector.broadcast %324 : vector<1x128xf32> to vector<16x128xf32>
    %c3_191 = arith.constant 3 : index
    %c0_192 = arith.constant 0 : index
    %c0_193 = arith.constant 0 : index
    %326 = vector.load %arg3[%c3_191, %c0_192, %c0_193] : memref<4x25x128xf32, #tpu.memory_space<vmem>>, vector<1x1x128xf32>
    %327 = vector.shape_cast %326 : vector<1x1x128xf32> to vector<1x128xf32>
    %328 = vector.broadcast %327 : vector<1x128xf32> to vector<16x128xf32>
    %329 = arith.mulf %306, %328 : vector<16x128xf32>
    %c3_194 = arith.constant 3 : index
    %c5_195 = arith.constant 5 : index
    %c0_196 = arith.constant 0 : index
    %330 = vector.load %arg3[%c3_194, %c5_195, %c0_196] : memref<4x25x128xf32, #tpu.memory_space<vmem>>, vector<1x1x128xf32>
    %331 = vector.shape_cast %330 : vector<1x1x128xf32> to vector<1x128xf32>
    %332 = vector.broadcast %331 : vector<1x128xf32> to vector<16x128xf32>
    %333 = arith.mulf %311, %332 : vector<16x128xf32>
    %334 = arith.addf %329, %333 : vector<16x128xf32>
    %c3_197 = arith.constant 3 : index
    %c10_198 = arith.constant 10 : index
    %c0_199 = arith.constant 0 : index
    %335 = vector.load %arg3[%c3_197, %c10_198, %c0_199] : memref<4x25x128xf32, #tpu.memory_space<vmem>>, vector<1x1x128xf32>
    %336 = vector.shape_cast %335 : vector<1x1x128xf32> to vector<1x128xf32>
    %337 = vector.broadcast %336 : vector<1x128xf32> to vector<16x128xf32>
    %338 = arith.mulf %301, %337 : vector<16x128xf32>
    %339 = arith.addf %334, %338 : vector<16x128xf32>
    %c3_200 = arith.constant 3 : index
    %c15_201 = arith.constant 15 : index
    %c0_202 = arith.constant 0 : index
    %340 = vector.load %arg3[%c3_200, %c15_201, %c0_202] : memref<4x25x128xf32, #tpu.memory_space<vmem>>, vector<1x1x128xf32>
    %341 = vector.shape_cast %340 : vector<1x1x128xf32> to vector<1x128xf32>
    %342 = vector.broadcast %341 : vector<1x128xf32> to vector<16x128xf32>
    %343 = arith.mulf %316, %342 : vector<16x128xf32>
    %344 = arith.addf %339, %343 : vector<16x128xf32>
    %c3_203 = arith.constant 3 : index
    %c20_204 = arith.constant 20 : index
    %c0_205 = arith.constant 0 : index
    %345 = vector.load %arg3[%c3_203, %c20_204, %c0_205] : memref<4x25x128xf32, #tpu.memory_space<vmem>>, vector<1x1x128xf32>
    %346 = vector.shape_cast %345 : vector<1x1x128xf32> to vector<1x128xf32>
    %347 = vector.broadcast %346 : vector<1x128xf32> to vector<16x128xf32>
    %348 = arith.mulf %321, %347 : vector<16x128xf32>
    %349 = arith.addf %344, %348 : vector<16x128xf32>
    %c16_i32_206 = arith.constant 16 : i32
    %350 = tpu.dynamic_rotate %349 by %c16_i32_206 dim 1 : vector<16x128xf32>, i32 -> vector<16x128xf32>
    %351 = arith.addf %325, %350 : vector<16x128xf32>
    %c3_207 = arith.constant 3 : index
    %c1_208 = arith.constant 1 : index
    %c0_209 = arith.constant 0 : index
    %352 = vector.load %arg3[%c3_207, %c1_208, %c0_209] : memref<4x25x128xf32, #tpu.memory_space<vmem>>, vector<1x1x128xf32>
    %353 = vector.shape_cast %352 : vector<1x1x128xf32> to vector<1x128xf32>
    %354 = vector.broadcast %353 : vector<1x128xf32> to vector<16x128xf32>
    %355 = arith.mulf %306, %354 : vector<16x128xf32>
    %c3_210 = arith.constant 3 : index
    %c6_211 = arith.constant 6 : index
    %c0_212 = arith.constant 0 : index
    %356 = vector.load %arg3[%c3_210, %c6_211, %c0_212] : memref<4x25x128xf32, #tpu.memory_space<vmem>>, vector<1x1x128xf32>
    %357 = vector.shape_cast %356 : vector<1x1x128xf32> to vector<1x128xf32>
    %358 = vector.broadcast %357 : vector<1x128xf32> to vector<16x128xf32>
    %359 = arith.mulf %311, %358 : vector<16x128xf32>
    %360 = arith.addf %355, %359 : vector<16x128xf32>
    %c3_213 = arith.constant 3 : index
    %c11_214 = arith.constant 11 : index
    %c0_215 = arith.constant 0 : index
    %361 = vector.load %arg3[%c3_213, %c11_214, %c0_215] : memref<4x25x128xf32, #tpu.memory_space<vmem>>, vector<1x1x128xf32>
    %362 = vector.shape_cast %361 : vector<1x1x128xf32> to vector<1x128xf32>
    %363 = vector.broadcast %362 : vector<1x128xf32> to vector<16x128xf32>
    %364 = arith.mulf %301, %363 : vector<16x128xf32>
    %365 = arith.addf %360, %364 : vector<16x128xf32>
    %c3_216 = arith.constant 3 : index
    %c16_217 = arith.constant 16 : index
    %c0_218 = arith.constant 0 : index
    %366 = vector.load %arg3[%c3_216, %c16_217, %c0_218] : memref<4x25x128xf32, #tpu.memory_space<vmem>>, vector<1x1x128xf32>
    %367 = vector.shape_cast %366 : vector<1x1x128xf32> to vector<1x128xf32>
    %368 = vector.broadcast %367 : vector<1x128xf32> to vector<16x128xf32>
    %369 = arith.mulf %316, %368 : vector<16x128xf32>
    %370 = arith.addf %365, %369 : vector<16x128xf32>
    %c3_219 = arith.constant 3 : index
    %c21_220 = arith.constant 21 : index
    %c0_221 = arith.constant 0 : index
    %371 = vector.load %arg3[%c3_219, %c21_220, %c0_221] : memref<4x25x128xf32, #tpu.memory_space<vmem>>, vector<1x1x128xf32>
    %372 = vector.shape_cast %371 : vector<1x1x128xf32> to vector<1x128xf32>
    %373 = vector.broadcast %372 : vector<1x128xf32> to vector<16x128xf32>
    %374 = arith.mulf %321, %373 : vector<16x128xf32>
    %375 = arith.addf %370, %374 : vector<16x128xf32>
    %c8_i32_222 = arith.constant 8 : i32
    %376 = tpu.dynamic_rotate %375 by %c8_i32_222 dim 1 : vector<16x128xf32>, i32 -> vector<16x128xf32>
    %377 = arith.addf %351, %376 : vector<16x128xf32>
    %c3_223 = arith.constant 3 : index
    %c2_224 = arith.constant 2 : index
    %c0_225 = arith.constant 0 : index
    %378 = vector.load %arg3[%c3_223, %c2_224, %c0_225] : memref<4x25x128xf32, #tpu.memory_space<vmem>>, vector<1x1x128xf32>
    %379 = vector.shape_cast %378 : vector<1x1x128xf32> to vector<1x128xf32>
    %380 = vector.broadcast %379 : vector<1x128xf32> to vector<16x128xf32>
    %381 = arith.mulf %306, %380 : vector<16x128xf32>
    %c3_226 = arith.constant 3 : index
    %c7_227 = arith.constant 7 : index
    %c0_228 = arith.constant 0 : index
    %382 = vector.load %arg3[%c3_226, %c7_227, %c0_228] : memref<4x25x128xf32, #tpu.memory_space<vmem>>, vector<1x1x128xf32>
    %383 = vector.shape_cast %382 : vector<1x1x128xf32> to vector<1x128xf32>
    %384 = vector.broadcast %383 : vector<1x128xf32> to vector<16x128xf32>
    %385 = arith.mulf %311, %384 : vector<16x128xf32>
    %386 = arith.addf %381, %385 : vector<16x128xf32>
    %c3_229 = arith.constant 3 : index
    %c12_230 = arith.constant 12 : index
    %c0_231 = arith.constant 0 : index
    %387 = vector.load %arg3[%c3_229, %c12_230, %c0_231] : memref<4x25x128xf32, #tpu.memory_space<vmem>>, vector<1x1x128xf32>
    %388 = vector.shape_cast %387 : vector<1x1x128xf32> to vector<1x128xf32>
    %389 = vector.broadcast %388 : vector<1x128xf32> to vector<16x128xf32>
    %390 = arith.mulf %301, %389 : vector<16x128xf32>
    %391 = arith.addf %386, %390 : vector<16x128xf32>
    %c3_232 = arith.constant 3 : index
    %c17_233 = arith.constant 17 : index
    %c0_234 = arith.constant 0 : index
    %392 = vector.load %arg3[%c3_232, %c17_233, %c0_234] : memref<4x25x128xf32, #tpu.memory_space<vmem>>, vector<1x1x128xf32>
    %393 = vector.shape_cast %392 : vector<1x1x128xf32> to vector<1x128xf32>
    %394 = vector.broadcast %393 : vector<1x128xf32> to vector<16x128xf32>
    %395 = arith.mulf %316, %394 : vector<16x128xf32>
    %396 = arith.addf %391, %395 : vector<16x128xf32>
    %c3_235 = arith.constant 3 : index
    %c22_236 = arith.constant 22 : index
    %c0_237 = arith.constant 0 : index
    %397 = vector.load %arg3[%c3_235, %c22_236, %c0_237] : memref<4x25x128xf32, #tpu.memory_space<vmem>>, vector<1x1x128xf32>
    %398 = vector.shape_cast %397 : vector<1x1x128xf32> to vector<1x128xf32>
    %399 = vector.broadcast %398 : vector<1x128xf32> to vector<16x128xf32>
    %400 = arith.mulf %321, %399 : vector<16x128xf32>
    %401 = arith.addf %396, %400 : vector<16x128xf32>
    %402 = arith.addf %377, %401 : vector<16x128xf32>
    %c3_238 = arith.constant 3 : index
    %c3_239 = arith.constant 3 : index
    %c0_240 = arith.constant 0 : index
    %403 = vector.load %arg3[%c3_238, %c3_239, %c0_240] : memref<4x25x128xf32, #tpu.memory_space<vmem>>, vector<1x1x128xf32>
    %404 = vector.shape_cast %403 : vector<1x1x128xf32> to vector<1x128xf32>
    %405 = vector.broadcast %404 : vector<1x128xf32> to vector<16x128xf32>
    %406 = arith.mulf %306, %405 : vector<16x128xf32>
    %c3_241 = arith.constant 3 : index
    %c8_242 = arith.constant 8 : index
    %c0_243 = arith.constant 0 : index
    %407 = vector.load %arg3[%c3_241, %c8_242, %c0_243] : memref<4x25x128xf32, #tpu.memory_space<vmem>>, vector<1x1x128xf32>
    %408 = vector.shape_cast %407 : vector<1x1x128xf32> to vector<1x128xf32>
    %409 = vector.broadcast %408 : vector<1x128xf32> to vector<16x128xf32>
    %410 = arith.mulf %311, %409 : vector<16x128xf32>
    %411 = arith.addf %406, %410 : vector<16x128xf32>
    %c3_244 = arith.constant 3 : index
    %c13_245 = arith.constant 13 : index
    %c0_246 = arith.constant 0 : index
    %412 = vector.load %arg3[%c3_244, %c13_245, %c0_246] : memref<4x25x128xf32, #tpu.memory_space<vmem>>, vector<1x1x128xf32>
    %413 = vector.shape_cast %412 : vector<1x1x128xf32> to vector<1x128xf32>
    %414 = vector.broadcast %413 : vector<1x128xf32> to vector<16x128xf32>
    %415 = arith.mulf %301, %414 : vector<16x128xf32>
    %416 = arith.addf %411, %415 : vector<16x128xf32>
    %c3_247 = arith.constant 3 : index
    %c18_248 = arith.constant 18 : index
    %c0_249 = arith.constant 0 : index
    %417 = vector.load %arg3[%c3_247, %c18_248, %c0_249] : memref<4x25x128xf32, #tpu.memory_space<vmem>>, vector<1x1x128xf32>
    %418 = vector.shape_cast %417 : vector<1x1x128xf32> to vector<1x128xf32>
    %419 = vector.broadcast %418 : vector<1x128xf32> to vector<16x128xf32>
    %420 = arith.mulf %316, %419 : vector<16x128xf32>
    %421 = arith.addf %416, %420 : vector<16x128xf32>
    %c3_250 = arith.constant 3 : index
    %c23_251 = arith.constant 23 : index
    %c0_252 = arith.constant 0 : index
    %422 = vector.load %arg3[%c3_250, %c23_251, %c0_252] : memref<4x25x128xf32, #tpu.memory_space<vmem>>, vector<1x1x128xf32>
    %423 = vector.shape_cast %422 : vector<1x1x128xf32> to vector<1x128xf32>
    %424 = vector.broadcast %423 : vector<1x128xf32> to vector<16x128xf32>
    %425 = arith.mulf %321, %424 : vector<16x128xf32>
    %426 = arith.addf %421, %425 : vector<16x128xf32>
    %c120_i32_253 = arith.constant 120 : i32
    %427 = tpu.dynamic_rotate %426 by %c120_i32_253 dim 1 : vector<16x128xf32>, i32 -> vector<16x128xf32>
    %428 = arith.addf %402, %427 : vector<16x128xf32>
    %c3_254 = arith.constant 3 : index
    %c4_255 = arith.constant 4 : index
    %c0_256 = arith.constant 0 : index
    %429 = vector.load %arg3[%c3_254, %c4_255, %c0_256] : memref<4x25x128xf32, #tpu.memory_space<vmem>>, vector<1x1x128xf32>
    %430 = vector.shape_cast %429 : vector<1x1x128xf32> to vector<1x128xf32>
    %431 = vector.broadcast %430 : vector<1x128xf32> to vector<16x128xf32>
    %432 = arith.mulf %306, %431 : vector<16x128xf32>
    %c3_257 = arith.constant 3 : index
    %c9_258 = arith.constant 9 : index
    %c0_259 = arith.constant 0 : index
    %433 = vector.load %arg3[%c3_257, %c9_258, %c0_259] : memref<4x25x128xf32, #tpu.memory_space<vmem>>, vector<1x1x128xf32>
    %434 = vector.shape_cast %433 : vector<1x1x128xf32> to vector<1x128xf32>
    %435 = vector.broadcast %434 : vector<1x128xf32> to vector<16x128xf32>
    %436 = arith.mulf %311, %435 : vector<16x128xf32>
    %437 = arith.addf %432, %436 : vector<16x128xf32>
    %c3_260 = arith.constant 3 : index
    %c14_261 = arith.constant 14 : index
    %c0_262 = arith.constant 0 : index
    %438 = vector.load %arg3[%c3_260, %c14_261, %c0_262] : memref<4x25x128xf32, #tpu.memory_space<vmem>>, vector<1x1x128xf32>
    %439 = vector.shape_cast %438 : vector<1x1x128xf32> to vector<1x128xf32>
    %440 = vector.broadcast %439 : vector<1x128xf32> to vector<16x128xf32>
    %441 = arith.mulf %301, %440 : vector<16x128xf32>
    %442 = arith.addf %437, %441 : vector<16x128xf32>
    %c3_263 = arith.constant 3 : index
    %c19_264 = arith.constant 19 : index
    %c0_265 = arith.constant 0 : index
    %443 = vector.load %arg3[%c3_263, %c19_264, %c0_265] : memref<4x25x128xf32, #tpu.memory_space<vmem>>, vector<1x1x128xf32>
    %444 = vector.shape_cast %443 : vector<1x1x128xf32> to vector<1x128xf32>
    %445 = vector.broadcast %444 : vector<1x128xf32> to vector<16x128xf32>
    %446 = arith.mulf %316, %445 : vector<16x128xf32>
    %447 = arith.addf %442, %446 : vector<16x128xf32>
    %c3_266 = arith.constant 3 : index
    %c24_267 = arith.constant 24 : index
    %c0_268 = arith.constant 0 : index
    %448 = vector.load %arg3[%c3_266, %c24_267, %c0_268] : memref<4x25x128xf32, #tpu.memory_space<vmem>>, vector<1x1x128xf32>
    %449 = vector.shape_cast %448 : vector<1x1x128xf32> to vector<1x128xf32>
    %450 = vector.broadcast %449 : vector<1x128xf32> to vector<16x128xf32>
    %451 = arith.mulf %321, %450 : vector<16x128xf32>
    %452 = arith.addf %447, %451 : vector<16x128xf32>
    %c112_i32_269 = arith.constant 112 : i32
    %453 = tpu.dynamic_rotate %452 by %c112_i32_269 dim 1 : vector<16x128xf32>, i32 -> vector<16x128xf32>
    %454 = arith.addf %428, %453 : vector<16x128xf32>
    %c0_270 = arith.constant 0 : index
    %c3_271 = arith.constant 3 : index
    %c0_272 = arith.constant 0 : index
    %c0_273 = arith.constant 0 : index
    %455 = vector.load %arg2[%c0_270, %c3_271, %c0_272, %c0_273] : memref<1x4x16x128xf32, #tpu.memory_space<vmem>>, vector<1x1x16x128xf32>
    %456 = vector.shape_cast %455 : vector<1x1x16x128xf32> to vector<16x128xf32>
    %457 = arith.mulf %454, %456 : vector<16x128xf32>
    %c0_274 = arith.constant 0 : index
    %c3_275 = arith.constant 3 : index
    %c0_276 = arith.constant 0 : index
    %c0_277 = arith.constant 0 : index
    %458 = vector.load %arg5[%c0_274, %c3_275, %c0_276, %c0_277] : memref<1x4x16x128xf32, #tpu.memory_space<vmem>>, vector<1x1x16x128xf32>
    %459 = vector.shape_cast %458 : vector<1x1x16x128xf32> to vector<16x128xf32>
    %460 = vector.shape_cast %457 : vector<16x128xf32> to vector<1x1x16x128xf32>
    tpu.vector_store %arg5[%c0_274, %c3_275, %c0_276, %c0_277], %460 {strides = array<i32>} : memref<1x4x16x128xf32, #tpu.memory_space<vmem>>, vector<1x1x16x128xf32>,
    return
  }
  func.func @transform_0(%arg0: i32) -> (i32, i32, i32, i32) {
    %c0_i32 = arith.constant 0 : i32
    %c0_i32_0 = arith.constant 0 : i32
    %c0_i32_1 = arith.constant 0 : i32
    %c0_i32_2 = arith.constant 0 : i32
    return %arg0, %c0_i32, %c0_i32_0, %c0_i32_1 : i32, i32, i32, i32
  }
  func.func @transform_1(%arg0: i32) -> (i32, i32, i32, i32) {
    %c0_i32 = arith.constant 0 : i32
    %c0_i32_0 = arith.constant 0 : i32
    %c0_i32_1 = arith.constant 0 : i32
    %c0_i32_2 = arith.constant 0 : i32
    return %arg0, %c0_i32, %c0_i32_0, %c0_i32_1 : i32, i32, i32, i32
  }
  func.func @transform_2(%arg0: i32) -> (i32, i32, i32) {
    %c0_i32 = arith.constant 0 : i32
    %c0_i32_0 = arith.constant 0 : i32
    %c0_i32_1 = arith.constant 0 : i32
    %c0_i32_2 = arith.constant 0 : i32
    return %c0_i32, %c0_i32_0, %c0_i32_1 : i32, i32, i32
  }
  func.func @transform_3(%arg0: i32) -> (i32, i32, i32) {
    %c0_i32 = arith.constant 0 : i32
    %c0_i32_0 = arith.constant 0 : i32
    %c0_i32_1 = arith.constant 0 : i32
    %c0_i32_2 = arith.constant 0 : i32
    return %c0_i32, %c0_i32_0, %c0_i32_1 : i32, i32, i32
  }
  func.func @transform_4(%arg0: i32) -> (i32, i32, i32, i32) {
    %c0_i32 = arith.constant 0 : i32
    %c0_i32_0 = arith.constant 0 : i32
    %c0_i32_1 = arith.constant 0 : i32
    %c0_i32_2 = arith.constant 0 : i32
    return %arg0, %c0_i32, %c0_i32_0, %c0_i32_1 : i32, i32, i32, i32
  }
}

</mosaic_0001>

<llo_original>
// kernel: tpu_custom_call.1
$region0: #{tpu_custom_call.1}
  #allocation0 [shape = 'u32[]', space=smem, size = 0x4, offset = 0x4, fixed_abs, tag = 'smem constant byte address 0x4 - core index']
  #allocation1 [shape = 'u32[72,128]{1,0:T(1,128)}', space=vmem, size = 0x9000, scoped, tag = 'internal scratch']
  %s0 = inlined_call_operand.vmem [shape: f32[2,4,16,128], index: 0, kind: input, shape index: {}]
  %s1 = inlined_call_operand.hbm [shape: f32[2,4,16,128], index: 1, kind: input, shape index: {}]
  %s2 = inlined_call_operand.vmem [shape: f32[4,25,128], index: 2, kind: input, shape index: {}]
  %s3 = inlined_call_operand.vmem [shape: f32[4,1,128], index: 3, kind: input, shape index: {}]
  %s4 = inlined_call_operand.hbm [shape: f32[2,4,16,128], index: 4, kind: output, shape index: {}]
  %s5 = sld [smem:[#allocation0]]
  $region53: #{tpu_custom_call.1} parent=0
    _
  %s7 = ssub.s32 1, %s5
  %s8 = scalar_select 0, %s7, %s5
  $region1: #{tpu_custom_call.1} parent=0
    #allocation2 [shape = 'u8[65536]{0}', space=vmem, size = 0x10000, scoped, tag = 'input window, operand 1']
    #allocation3 [shape = 's32[2]{0}', space=sflag, size = 0x8, scoped, tag = 'scoped memory for tpu_custom_call.1']
    #allocation4 [shape = 's32[2]{0}', space=sflag, size = 0x8, scoped, tag = 'scoped memory for tpu_custom_call.1']
    #allocation5 [shape = 'u8[65536]{0}', space=vmem, size = 0x10000, scoped, tag = 'output window, operand 0']
    %9 = vsyncpa [#allocation3], 0
    %s10 = scalar_lea.sflag [#allocation3], 1
    %11 = vsyncpa %s10, 0
    %12 = vsyncpa [#allocation4], 0
    %s13 = scalar_lea.sflag [#allocation4], 1
    %14 = vsyncpa %s13, 0
    loop: start=0, step=1, limit=4
    $region2: #{tpu_custom_call.1} parent=1 // loop_pre_header
      _
    $region3: #{tpu_custom_call.1} parent=1 // loop_header
      %s16 = sphi 0, %s20
      %p17 = scmp.ge.s32.totalorder %s16, 4
      %s26 = sphi 0, %s28
      %s29 = sphi 0, %s26
      %s30 = sphi 0, %s29
      %s46 = sphi 0, %s30
      %s52 = sphi 0, %s54
      %s55 = sphi 0, %s52
      %s56 = sphi 0, %s55
      %s72 = sphi 0, %s56
      %s76 = sphi 0, %s76
      %s78 = sphi 0, %s76
      %s79 = sphi 0, %s78
      %s93 = sphi 0, %s79
      %s97 = sphi 0, %s97
      %s99 = sphi 0, %s97
      %s100 = sphi 0, %s99
      %s114 = sphi 0, %s100
      %s120 = sphi 0, %s122
      %s123 = sphi 0, %s120
      %s124 = sphi 0, %s123
      %s140 = sphi 0, %s124
    $region4: #{tpu_custom_call.1} parent=1 // loop_header_branch
      %19 = sbr.rel (%p17) target = $region8
    $region5: #{tpu_custom_call.1} parent=1 // loop_body
      %s21 = ssub.s32 %s16, 1
      %s22 = ssub.s32 %s16, 2
      %s23 = sadd.s32 %s16, 1
      %s24 = ssub.s32 %s16, %s23
      %p25 = scmp.eq.s32.totalorder %s24, 0
      %s27 = sadd.s32 %s26, 1
      %s28 = scalar_select %p25, %s26, %s27
      %p31 = pneg %p25
      %p32 = scmp.eq.s32.totalorder %s16, 1
      %p33 = por %p31, %p32
      %p34 = scmp.ne.s32.totalorder %s26, %s29
      %p35 = scmp.eq.s32.totalorder %s16, 0
      %p36 = por %p34, %p35
      %p37 = scmp.ne.s32.totalorder %s26, %s29
      %p38 = scmp.eq.s32.totalorder %s21, 1
      %p39 = por %p37, %p38
      %p40 = scmp.ne.s32.totalorder %s29, %s30
      %p41 = scmp.eq.s32.totalorder %s21, 0
      %p42 = por %p40, %p41
      %p43 = scmp.ne.s32.totalorder %s29, %s30
      %p44 = scmp.eq.s32.totalorder %s22, 1
      %p45 = por %p43, %p44
      %p47 = scmp.ne.s32.totalorder %s30, %s46
      %p48 = scmp.eq.s32.totalorder %s22, 0
      %p49 = por %p47, %p48
      %s50 = ssub.s32 %s16, %s23
      %p51 = scmp.eq.s32.totalorder %s50, 0
      %s53 = sadd.s32 %s52, 1
      %s54 = scalar_select %p51, %s52, %s53
      %p57 = pneg %p51
      %p58 = scmp.eq.s32.totalorder %s16, 1
      %p59 = por %p57, %p58
      %p60 = scmp.ne.s32.totalorder %s52, %s55
      %p61 = scmp.eq.s32.totalorder %s16, 0
      %p62 = por %p60, %p61
      %p63 = scmp.ne.s32.totalorder %s52, %s55
      %p64 = scmp.eq.s32.totalorder %s21, 1
      %p65 = por %p63, %p64
      %p66 = scmp.ne.s32.totalorder %s55, %s56
      %p67 = scmp.eq.s32.totalorder %s21, 0
      %p68 = por %p66, %p67
      %p69 = scmp.ne.s32.totalorder %s55, %s56
      %p70 = scmp.eq.s32.totalorder %s22, 1
      %p71 = por %p69, %p70
      %p73 = scmp.ne.s32.totalorder %s56, %s72
      %p74 = scmp.eq.s32.totalorder %s22, 0
      %p75 = por %p73, %p74
      %s77 = sadd.s32 %s76, 1
      %p80 = scmp.eq.s32.totalorder %s16, 1
      %p81 = scmp.ne.s32.totalorder %s76, %s78
      %p82 = scmp.eq.s32.totalorder %s16, 0
      %p83 = por %p81, %p82
      %p84 = scmp.ne.s32.totalorder %s76, %s78
      %p85 = scmp.eq.s32.totalorder %s21, 1
      %p86 = por %p84, %p85
      %p87 = scmp.ne.s32.totalorder %s78, %s79
      %p88 = scmp.eq.s32.totalorder %s21, 0
      %p89 = por %p87, %p88
      %p90 = scmp.ne.s32.totalorder %s78, %s79
      %p91 = scmp.eq.s32.totalorder %s22, 1
      %p92 = por %p90, %p91
      %p94 = scmp.ne.s32.totalorder %s79, %s93
      %p95 = scmp.eq.s32.totalorder %s22, 0
      %p96 = por %p94, %p95
      %s98 = sadd.s32 %s97, 1
      %p101 = scmp.eq.s32.totalorder %s16, 1
      %p102 = scmp.ne.s32.totalorder %s97, %s99
      %p103 = scmp.eq.s32.totalorder %s16, 0
      %p104 = por %p102, %p103
      %p105 = scmp.ne.s32.totalorder %s97, %s99
      %p106 = scmp.eq.s32.totalorder %s21, 1
      %p107 = por %p105, %p106
      %p108 = scmp.ne.s32.totalorder %s99, %s100
      %p109 = scmp.eq.s32.totalorder %s21, 0
      %p110 = por %p108, %p109
      %p111 = scmp.ne.s32.totalorder %s99, %s100
      %p112 = scmp.eq.s32.totalorder %s22, 1
      %p113 = por %p111, %p112
      %p115 = scmp.ne.s32.totalorder %s100, %s114
      %p116 = scmp.eq.s32.totalorder %s22, 0
      %p117 = por %p115, %p116
      %s118 = ssub.s32 %s16, %s23
      %p119 = scmp.eq.s32.totalorder %s118, 0
      %s121 = sadd.s32 %s120, 1
      %s122 = scalar_select %p119, %s120, %s121
      %p125 = pneg %p119
      %p126 = scmp.eq.s32.totalorder %s16, 1
      %p127 = por %p125, %p126
      %p128 = scmp.ne.s32.totalorder %s120, %s123
      %p129 = scmp.eq.s32.totalorder %s16, 0
      %p130 = por %p128, %p129
      %p131 = scmp.ne.s32.totalorder %s120, %s123
      %p132 = scmp.eq.s32.totalorder %s21, 1
      %p133 = por %p131, %p132
      %p134 = scmp.ne.s32.totalorder %s123, %s124
      %p135 = scmp.eq.s32.totalorder %s21, 0
      %p136 = por %p134, %p135
      %p137 = scmp.ne.s32.totalorder %s123, %s124
      %p138 = scmp.eq.s32.totalorder %s22, 1
      %p139 = por %p137, %p138
      %p141 = scmp.ne.s32.totalorder %s124, %s140
      %p142 = scmp.eq.s32.totalorder %s22, 0
      %p143 = por %p141, %p142
      %p144 = scmp.le.s32.totalorder 1, %s16
      %p145 = scmp.lt.s32.totalorder %s16, 3
      %p146 = pnand %p144, %p145
      %p147 = pneg %p146
      // Predicated region
      $region9: #{tpu_custom_call.1} parent=5 // pred_check
        _
      $region10: #{tpu_custom_call.1} parent=5 // pred_check_branch
        %149 = sbr.rel (%p146) target = $region12
      $region11: #{tpu_custom_call.1} parent=5 // pred_region
        %s150 = ssub.s32 %s16, 1
        // Predicated region
        $region13: #{tpu_custom_call.1} parent=11 // pred_check
          %p151 = pneg %p89
        $region14: #{tpu_custom_call.1} parent=11 // pred_check_branch
          %153 = sbr.rel (%p151) target = $region16
        $region15: #{tpu_custom_call.1} parent=11 // pred_region
          _
        $region16: #{tpu_custom_call.1} parent=11 // pred_fallthru
          _
        // Predicated region
        $region17: #{tpu_custom_call.1} parent=11 // pred_check
          %p154 = pneg %p110
        $region18: #{tpu_custom_call.1} parent=11 // pred_check_branch
          %156 = sbr.rel (%p154) target = $region20
        $region19: #{tpu_custom_call.1} parent=11 // pred_region
          _
        $region20: #{tpu_custom_call.1} parent=11 // pred_fallthru
          _
      $region12: #{tpu_custom_call.1} parent=5 // pred_fallthru
        _
      %p157 = scmp.lt.s32.totalorder %s16, 2
      // Predicated region
      $region21: #{tpu_custom_call.1} parent=5 // pred_check
        %p158 = pneg %p157
      $region22: #{tpu_custom_call.1} parent=5 // pred_check_branch
        %160 = sbr.rel (%p158) target = $region24
      $region23: #{tpu_custom_call.1} parent=5 // pred_region
        // Predicated region
        $region25: #{tpu_custom_call.1} parent=23 // pred_check
          %p161 = pneg %p36
        $region26: #{tpu_custom_call.1} parent=23 // pred_check_branch
          %163 = sbr.rel (%p161) target = $region28
        $region27: #{tpu_custom_call.1} parent=23 // pred_region
          %p164 = scmp.lt.s32.totalorder %s16, 1
          %s165 = scalar_select %p164, %s16, 1
          %s166 = smul.addr %s165, 8
          %s167 = smul.addr %s166, 8
          %s168 = scalar_lea.vmem %s0, %s167
        $region28: #{tpu_custom_call.1} parent=23 // pred_fallthru
          _
        // Predicated region
        $region29: #{tpu_custom_call.1} parent=23 // pred_check
          %p169 = pneg %p62
        $region30: #{tpu_custom_call.1} parent=23 // pred_check_branch
          %171 = sbr.rel (%p169) target = $region32
        $region31: #{tpu_custom_call.1} parent=23 // pred_region
          %s172 = sand.u32 %s52, 1
          %s173 = scalar_lea.sflag [#allocation3], %s172
          %s174 = sand.u32 %s52, 1
          %s175 = smul.addr %s174, 64
          %s176 = scalar_lea.vmem [#allocation2], %s175
          %178 = vsyncadd %s173, 0
          %s179 = smul.addr %s16, 8
          %s180 = smul.addr %s179, 8
          %s181 = scalar_lea.hbm %s1, %s180
          %s182 = sshll.u32 %s181, 4
          %s183 = int_to_ptr.hbm [resolvable:$true] %s182
          %s184 = sshll.u32 %s176, 4
          %s185 = int_to_ptr.vmem [resolvable:$true] %s184
          %190 = dma.hbm_to_vmem [thread:$0]  %s183, 1024, %s185, %s173, 128, 128, 8
        $region32: #{tpu_custom_call.1} parent=23 // pred_fallthru
          _
      $region24: #{tpu_custom_call.1} parent=5 // pred_fallthru
        _
      %p191 = scmp.le.s32.totalorder 1, %s16
      %p192 = scmp.lt.s32.totalorder %s16, 3
      %p193 = pnand %p191, %p192
      %p194 = pneg %p193
      // Predicated region
      $region33: #{tpu_custom_call.1} parent=5 // pred_check
        _
      $region34: #{tpu_custom_call.1} parent=5 // pred_check_branch
        %196 = sbr.rel (%p193) target = $region36
      $region35: #{tpu_custom_call.1} parent=5 // pred_region
        %s197 = ssub.s32 %s16, 1
        %s198 = sand.u32 %s55, 1
        %s199 = scalar_lea.sflag [#allocation3], %s198
        %s200 = sand.u32 %s55, 1
        %s201 = smul.addr %s200, 64
        %s202 = scalar_lea.vmem [#allocation2], %s201
        // Predicated region
        $region37: #{tpu_custom_call.1} parent=35 // pred_check
          %p203 = pneg %p68
        $region38: #{tpu_custom_call.1} parent=35 // pred_check_branch
          %205 = sbr.rel (%p203) target = $region40
        $region39: #{tpu_custom_call.1} parent=35 // pred_region
          %207 = dma.done %s199, 1024
        $region40: #{tpu_custom_call.1} parent=35 // pred_fallthru
          _
        %p208 = scmp.lt.s32.totalorder %s21, 1
        %s209 = scalar_select %p208, %s21, 1
        %s210 = smul.addr %s209, 8
        %s211 = smul.addr %s210, 8
        %s212 = scalar_lea.vmem %s0, %s211
        %p213 = pneg %p42
        %p214 = pneg %p39
        %s215 = sand.u32 %s55, 1
        %s216 = scalar_lea.sflag [#allocation3], %s215
        %s217 = sand.u32 %s55, 1
        %s218 = smul.addr %s217, 64
        %s219 = scalar_lea.vmem [#allocation2], %s218
        %p220 = pneg %p68
        %p221 = pneg %p65
        %p222 = pneg %p89
        %p223 = pneg %p86
        %p224 = pneg %p110
        %p225 = pneg %p107
        %p226 = pneg %p136
        %p227 = pneg %p133
        %s228 = sand.u32 %s123, 1
        %s229 = scalar_lea.sflag [#allocation4], %s228
        %s230 = sand.u32 %s123, 1
        %s231 = smul.addr %s230, 64
        %s232 = scalar_lea.vmem [#allocation5], %s231
        %p233 = scmp.lt.s32.totalorder %s21, 1
        %s234 = scalar_select %p233, %s21, 1
        %s235 = smul.addr %s234, 8
        %s236 = smul.addr %s235, 8
        %s237 = scalar_lea.vmem %s0, %s236
        %v238 = vlaneseq
        %v239 = vshrl.u32 %v238, 7
        %v240 = vadd.s32 %v239, 8
        %v241 = vld [vmem:[%s237] sm:$0xff]
        %v242 = vld [vmem:[%s237 + $0x8] sm:$0xff]
        %v243 = vrot.slane %v241, 7
        %v244 = vrot.slane %v242, 7
        %vm245 = vcmp.lt.s32.totalorder %v239, 1
        %v246 = vsel %vm245, %v243, %v244
        %v247 = vsel %vm245, %v244, %v243
        %vm248 = vcmp.ge.s32.totalorder %v239, 1
        %vm249 = vcmp.ge.s32.totalorder %v240, 1
        %v250 = vsel %vm248, %v247, 0.0
        %v251 = vsel %vm249, %v246, 0.0
        %v252 = vrot.slane %v241, 1
        %v253 = vrot.slane %v242, 1
        %vm254 = vcmp.lt.s32.totalorder %v239, 7
        %v255 = vsel %vm254, %v252, %v253
        %v256 = vsel %vm254, %v253, %v252
        %vm257 = vcmp.lt.s32.totalorder %v239, 15
        %vm258 = vcmp.lt.s32.totalorder %v240, 15
        %v259 = vsel %vm257, %v255, 0.0
        %v260 = vsel %vm258, %v256, 0.0
        %v261 = vld [vmem:[%s3] sm:$0x1]
        %v263 = vperm.slane %v261, 0
        %v265 = vld [vmem:[%s2] sm:$0x1]
        %v266 = vperm.slane %v265, 0
        %v267 = vmul.f32 %v250, %v266
        %v268 = vmul.f32 %v251, %v266
        %v269 = vld [vmem:[%s2 + $0x3] sm:$0x1]
        %v270 = vperm.slane %v269, 0
        %v271 = vmul.f32 %v241, %v270
        %v272 = vmul.f32 %v242, %v270
        %v273 = vadd.f32 %v267, %v271
        %v274 = vadd.f32 %v268, %v272
        %v275 = vld [vmem:[%s2 + $0x6] sm:$0x1]
        %v276 = vperm.slane %v275, 0
        %v277 = vmul.f32 %v259, %v276
        %v278 = vmul.f32 %v260, %v276
        %v279 = vadd.f32 %v273, %v277
        %v280 = vadd.f32 %v274, %v278
        %281 = vrot.lane.b32.xlu0 %v279, 8
        %v282 = vpop.permute.xlu0 %281
        %283 = vrot.lane.b32.xlu0 %v280, 8
        %v284 = vpop.permute.xlu0 %283
        %v285 = vadd.f32 %v263, %v282
        %v286 = vadd.f32 %v263, %v284
        %v287 = vld [vmem:[%s2 + $0x1] sm:$0x1]
        %v288 = vperm.slane %v287, 0
        %v289 = vmul.f32 %v250, %v288
        %v290 = vmul.f32 %v251, %v288
        %v291 = vld [vmem:[%s2 + $0x4] sm:$0x1]
        %v292 = vperm.slane %v291, 0
        %v293 = vmul.f32 %v241, %v292
        %v294 = vmul.f32 %v242, %v292
        %v295 = vadd.f32 %v289, %v293
        %v296 = vadd.f32 %v290, %v294
        %v297 = vld [vmem:[%s2 + $0x7] sm:$0x1]
        %v298 = vperm.slane %v297, 0
        %v299 = vmul.f32 %v259, %v298
        %v300 = vmul.f32 %v260, %v298
        %v301 = vadd.f32 %v295, %v299
        %v302 = vadd.f32 %v296, %v300
        %v303 = vadd.f32 %v285, %v301
        %v304 = vadd.f32 %v286, %v302
        %v305 = vld [vmem:[%s2 + $0x2] sm:$0x1]
        %v306 = vperm.slane %v305, 0
        %v307 = vmul.f32 %v250, %v306
        %v308 = vmul.f32 %v251, %v306
        %v309 = vld [vmem:[%s2 + $0x5] sm:$0x1]
        %v310 = vperm.slane %v309, 0
        %v311 = vmul.f32 %v241, %v310
        %v312 = vmul.f32 %v242, %v310
        %v313 = vadd.f32 %v307, %v311
        %v314 = vadd.f32 %v308, %v312
        %v315 = vld [vmem:[%s2 + $0x8] sm:$0x1]
        %v316 = vperm.slane %v315, 0
        %v317 = vmul.f32 %v259, %v316
        %v318 = vmul.f32 %v260, %v316
        %v319 = vadd.f32 %v313, %v317
        %v320 = vadd.f32 %v314, %v318
        %321 = vrot.lane.b32.xlu0 %v319, 120
        %v322 = vpop.permute.xlu0 %321
        %323 = vrot.lane.b32.xlu0 %v320, 120
        %v324 = vpop.permute.xlu0 %323
        %v325 = vadd.f32 %v303, %v322
        %v326 = vadd.f32 %v304, %v324
        %v327 = vld [vmem:[%s202] sm:$0xff]
        %v328 = vld [vmem:[%s202 + $0x8] sm:$0xff]
        %v329 = vmul.f32 %v325, %v327
        %v330 = vmul.f32 %v326, %v328
        %331 = vst [vmem:[%s232] sm:$0xff] %v329
        %332 = vst [vmem:[%s232 + $0x8] sm:$0xff] %v330
        %s333 = scalar_lea.vmem %s237, 16
        %v334 = vld [vmem:[%s333] sm:$0xff]
        %v335 = vld [vmem:[%s333 + $0x8] sm:$0xff]
        %v336 = vrot.slane %v334, 7
        %v337 = vrot.slane %v335, 7
        %v338 = vsel %vm245, %v336, %v337
        %v339 = vsel %vm245, %v337, %v336
        %v340 = vsel %vm248, %v339, 0.0
        %v341 = vsel %vm249, %v338, 0.0
        %v342 = vrot.slane %v334, 1
        %v343 = vrot.slane %v335, 1
        %v344 = vsel %vm254, %v342, %v343
        %v345 = vsel %vm254, %v343, %v342
        %v346 = vsel %vm257, %v344, 0.0
        %v347 = vsel %vm258, %v345, 0.0
        %s348 = scalar_lea.vmem %s3, 1
        %v349 = vld [vmem:[%s348] sm:$0x1]
        %v351 = vperm.slane %v349, 0
        %s353 = scalar_lea.vmem %s2, 32
        %v354 = vld [vmem:[%s353] sm:$0x1]
        %v355 = vperm.slane %v354, 0
        %v356 = vmul.f32 %v340, %v355
        %v357 = vmul.f32 %v341, %v355
        %v358 = vld [vmem:[%s353 + $0x3] sm:$0x1]
        %v359 = vperm.slane %v358, 0
        %v360 = vmul.f32 %v334, %v359
        %v361 = vmul.f32 %v335, %v359
        %v362 = vadd.f32 %v356, %v360
        %v363 = vadd.f32 %v357, %v361
        %v364 = vld [vmem:[%s353 + $0x6] sm:$0x1]
        %v365 = vperm.slane %v364, 0
        %v366 = vmul.f32 %v346, %v365
        %v367 = vmul.f32 %v347, %v365
        %v368 = vadd.f32 %v362, %v366
        %v369 = vadd.f32 %v363, %v367
        %370 = vrot.lane.b32.xlu0 %v368, 8
        %v371 = vpop.permute.xlu0 %370
        %372 = vrot.lane.b32.xlu0 %v369, 8
        %v373 = vpop.permute.xlu0 %372
        %v374 = vadd.f32 %v351, %v371
        %v375 = vadd.f32 %v351, %v373
        %v376 = vld [vmem:[%s353 + $0x1] sm:$0x1]
        %v377 = vperm.slane %v376, 0
        %v378 = vmul.f32 %v340, %v377
        %v379 = vmul.f32 %v341, %v377
        %v380 = vld [vmem:[%s353 + $0x4] sm:$0x1]
        %v381 = vperm.slane %v380, 0
        %v382 = vmul.f32 %v334, %v381
        %v383 = vmul.f32 %v335, %v381
        %v384 = vadd.f32 %v378, %v382
        %v385 = vadd.f32 %v379, %v383
        %v386 = vld [vmem:[%s353 + $0x7] sm:$0x1]
        %v387 = vperm.slane %v386, 0
        %v388 = vmul.f32 %v346, %v387
        %v389 = vmul.f32 %v347, %v387
        %v390 = vadd.f32 %v384, %v388
        %v391 = vadd.f32 %v385, %v389
        %v392 = vadd.f32 %v374, %v390
        %v393 = vadd.f32 %v375, %v391
        %v394 = vld [vmem:[%s353 + $0x2] sm:$0x1]
        %v395 = vperm.slane %v394, 0
        %v396 = vmul.f32 %v340, %v395
        %v397 = vmul.f32 %v341, %v395
        %v398 = vld [vmem:[%s353 + $0x5] sm:$0x1]
        %v399 = vperm.slane %v398, 0
        %v400 = vmul.f32 %v334, %v399
        %v401 = vmul.f32 %v335, %v399
        %v402 = vadd.f32 %v396, %v400
        %v403 = vadd.f32 %v397, %v401
        %v404 = vld [vmem:[%s353 + $0x8] sm:$0x1]
        %v405 = vperm.slane %v404, 0
        %v406 = vmul.f32 %v346, %v405
        %v407 = vmul.f32 %v347, %v405
        %v408 = vadd.f32 %v402, %v406
        %v409 = vadd.f32 %v403, %v407
        %410 = vrot.lane.b32.xlu0 %v408, 120
        %v411 = vpop.permute.xlu0 %410
        %412 = vrot.lane.b32.xlu0 %v409, 120
        %v413 = vpop.permute.xlu0 %412
        %v414 = vadd.f32 %v392, %v411
        %v415 = vadd.f32 %v393, %v413
        %s416 = scalar_lea.vmem %s202, 16 [#allocation2]
        %v417 = vld [vmem:[%s416] sm:$0xff]
        %v418 = vld [vmem:[%s416 + $0x8] sm:$0xff]
        %v419 = vmul.f32 %v414, %v417
        %v420 = vmul.f32 %v415, %v418
        %s421 = scalar_lea.vmem %s232, 16 [#allocation5]
        %422 = vst [vmem:[%s421] sm:$0xff] %v419
        %423 = vst [vmem:[%s421 + $0x8] sm:$0xff] %v420
        %s424 = scalar_lea.vmem %s237, 32
        %v425 = vld [vmem:[%s424] sm:$0xff]
        %v426 = vld [vmem:[%s424 + $0x8] sm:$0xff]
        %v427 = vrot.slane %v425, 6
        %v428 = vrot.slane %v426, 6
        %vm429 = vcmp.lt.s32.totalorder %v239, 2
        %v430 = vsel %vm429, %v427, %v428
        %v431 = vsel %vm429, %v428, %v427
        %vm432 = vcmp.ge.s32.totalorder %v239, 2
        %vm433 = vcmp.ge.s32.totalorder %v240, 2
        %v434 = vsel %vm432, %v431, 0.0
        %v435 = vsel %vm433, %v430, 0.0
        %v436 = vrot.slane %v425, 7
        %v437 = vrot.slane %v426, 7
        %v438 = vsel %vm245, %v436, %v437
        %v439 = vsel %vm245, %v437, %v436
        %v440 = vsel %vm248, %v439, 0.0
        %v441 = vsel %vm249, %v438, 0.0
        %v442 = vrot.slane %v425, 1
        %v443 = vrot.slane %v426, 1
        %v444 = vsel %vm254, %v442, %v443
        %v445 = vsel %vm254, %v443, %v442
        %v446 = vsel %vm257, %v444, 0.0
        %v447 = vsel %vm258, %v445, 0.0
        %v448 = vrot.slane %v425, 2
        %v449 = vrot.slane %v426, 2
        %vm450 = vcmp.lt.s32.totalorder %v239, 6
        %v451 = vsel %vm450, %v448, %v449
        %v452 = vsel %vm450, %v449, %v448
        %vm453 = vcmp.lt.s32.totalorder %v239, 14
        %vm454 = vcmp.lt.s32.totalorder %v240, 14
        %v455 = vsel %vm453, %v451, 0.0
        %v456 = vsel %vm454, %v452, 0.0
        %s457 = scalar_lea.vmem %s3, 2
        %v458 = vld [vmem:[%s457] sm:$0x1]
        %v460 = vperm.slane %v458, 0
        %s462 = scalar_lea.vmem %s2, 64
        %v463 = vld [vmem:[%s462] sm:$0x1]
        %v464 = vperm.slane %v463, 0
        %v465 = vmul.f32 %v434, %v464
        %v466 = vmul.f32 %v435, %v464
        %v467 = vld [vmem:[%s462 + $0x5] sm:$0x1]
        %v468 = vperm.slane %v467, 0
        %v469 = vmul.f32 %v440, %v468
        %v470 = vmul.f32 %v441, %v468
        %v471 = vadd.f32 %v465, %v469
        %v472 = vadd.f32 %v466, %v470
        %v473 = vld [vmem:[%s462 + $0xa] sm:$0x1]
        %v474 = vperm.slane %v473, 0
        %v475 = vmul.f32 %v425, %v474
        %v476 = vmul.f32 %v426, %v474
        %v477 = vadd.f32 %v471, %v475
        %v478 = vadd.f32 %v472, %v476
        %v479 = vld [vmem:[%s462 + $0xf] sm:$0x1]
        %v480 = vperm.slane %v479, 0
        %v481 = vmul.f32 %v446, %v480
        %v482 = vmul.f32 %v447, %v480
        %v483 = vadd.f32 %v477, %v481
        %v484 = vadd.f32 %v478, %v482
        %v485 = vld [vmem:[%s462 + $0x14] sm:$0x1]
        %v486 = vperm.slane %v485, 0
        %v487 = vmul.f32 %v455, %v486
        %v488 = vmul.f32 %v456, %v486
        %v489 = vadd.f32 %v483, %v487
        %v490 = vadd.f32 %v484, %v488
        %491 = vrot.lane.b32.xlu0 %v489, 16
        %v492 = vpop.permute.xlu0 %491
        %493 = vrot.lane.b32.xlu0 %v490, 16
        %v494 = vpop.permute.xlu0 %493
        %v495 = vadd.f32 %v460, %v492
        %v496 = vadd.f32 %v460, %v494
        %v497 = vld [vmem:[%s462 + $0x1] sm:$0x1]
        %v498 = vperm.slane %v497, 0
        %v499 = vmul.f32 %v434, %v498
        %v500 = vmul.f32 %v435, %v498
        %v501 = vld [vmem:[%s462 + $0x6] sm:$0x1]
        %v502 = vperm.slane %v501, 0
        %v503 = vmul.f32 %v440, %v502
        %v504 = vmul.f32 %v441, %v502
        %v505 = vadd.f32 %v499, %v503
        %v506 = vadd.f32 %v500, %v504
        %v507 = vld [vmem:[%s462 + $0xb] sm:$0x1]
        %v508 = vperm.slane %v507, 0
        %v509 = vmul.f32 %v425, %v508
        %v510 = vmul.f32 %v426, %v508
        %v511 = vadd.f32 %v505, %v509
        %v512 = vadd.f32 %v506, %v510
        %v513 = vld [vmem:[%s462 + $0x10] sm:$0x1]
        %v514 = vperm.slane %v513, 0
        %v515 = vmul.f32 %v446, %v514
        %v516 = vmul.f32 %v447, %v514
        %v517 = vadd.f32 %v511, %v515
        %v518 = vadd.f32 %v512, %v516
        %v519 = vld [vmem:[%s462 + $0x15] sm:$0x1]
        %v520 = vperm.slane %v519, 0
        %v521 = vmul.f32 %v455, %v520
        %v522 = vmul.f32 %v456, %v520
        %v523 = vadd.f32 %v517, %v521
        %v524 = vadd.f32 %v518, %v522
        %525 = vrot.lane.b32.xlu0 %v523, 8
        %v526 = vpop.permute.xlu0 %525
        %527 = vrot.lane.b32.xlu0 %v524, 8
        %v528 = vpop.permute.xlu0 %527
        %v529 = vadd.f32 %v495, %v526
        %v530 = vadd.f32 %v496, %v528
        %v531 = vld [vmem:[%s462 + $0x2] sm:$0x1]
        %v532 = vperm.slane %v531, 0
        %v533 = vmul.f32 %v434, %v532
        %v534 = vmul.f32 %v435, %v532
        %v535 = vld [vmem:[%s462 + $0x7] sm:$0x1]
        %v536 = vperm.slane %v535, 0
        %v537 = vmul.f32 %v440, %v536
        %v538 = vmul.f32 %v441, %v536
        %v539 = vadd.f32 %v533, %v537
        %v540 = vadd.f32 %v534, %v538
        %v541 = vld [vmem:[%s462 + $0xc] sm:$0x1]
        %v542 = vperm.slane %v541, 0
        %v543 = vmul.f32 %v425, %v542
        %v544 = vmul.f32 %v426, %v542
        %v545 = vadd.f32 %v539, %v543
        %v546 = vadd.f32 %v540, %v544
        %v547 = vld [vmem:[%s462 + $0x11] sm:$0x1]
        %v548 = vperm.slane %v547, 0
        %v549 = vmul.f32 %v446, %v548
        %v550 = vmul.f32 %v447, %v548
        %v551 = vadd.f32 %v545, %v549
        %v552 = vadd.f32 %v546, %v550
        %v553 = vld [vmem:[%s462 + $0x16] sm:$0x1]
        %v554 = vperm.slane %v553, 0
        %v555 = vmul.f32 %v455, %v554
        %v556 = vmul.f32 %v456, %v554
        %v557 = vadd.f32 %v551, %v555
        %v558 = vadd.f32 %v552, %v556
        %v559 = vadd.f32 %v529, %v557
        %v560 = vadd.f32 %v530, %v558
        %v561 = vld [vmem:[%s462 + $0x3] sm:$0x1]
        %v562 = vperm.slane %v561, 0
        %v563 = vmul.f32 %v434, %v562
        %v564 = vmul.f32 %v435, %v562
        %v565 = vld [vmem:[%s462 + $0x8] sm:$0x1]
        %v566 = vperm.slane %v565, 0
        %v567 = vmul.f32 %v440, %v566
        %v568 = vmul.f32 %v441, %v566
        %v569 = vadd.f32 %v563, %v567
        %v570 = vadd.f32 %v564, %v568
        %v571 = vld [vmem:[%s462 + $0xd] sm:$0x1]
        %v572 = vperm.slane %v571, 0
        %v573 = vmul.f32 %v425, %v572
        %v574 = vmul.f32 %v426, %v572
        %v575 = vadd.f32 %v569, %v573
        %v576 = vadd.f32 %v570, %v574
        %v577 = vld [vmem:[%s462 + $0x12] sm:$0x1]
        %v578 = vperm.slane %v577, 0
        %v579 = vmul.f32 %v446, %v578
        %v580 = vmul.f32 %v447, %v578
        %v581 = vadd.f32 %v575, %v579
        %v582 = vadd.f32 %v576, %v580
        %v583 = vld [vmem:[%s462 + $0x17] sm:$0x1]
        %v584 = vperm.slane %v583, 0
        %v585 = vmul.f32 %v455, %v584
        %v586 = vmul.f32 %v456, %v584
        %v587 = vadd.f32 %v581, %v585
        %v588 = vadd.f32 %v582, %v586
        %589 = vrot.lane.b32.xlu0 %v587, 120
        %v590 = vpop.permute.xlu0 %589
        %591 = vrot.lane.b32.xlu0 %v588, 120
        %v592 = vpop.permute.xlu0 %591
        %v593 = vadd.f32 %v559, %v590
        %v594 = vadd.f32 %v560, %v592
        %v595 = vld [vmem:[%s462 + $0x4] sm:$0x1]
        %v596 = vperm.slane %v595, 0
        %v597 = vmul.f32 %v434, %v596
        %v598 = vmul.f32 %v435, %v596
        %v599 = vld [vmem:[%s462 + $0x9] sm:$0x1]
        %v600 = vperm.slane %v599, 0
        %v601 = vmul.f32 %v440, %v600
        %v602 = vmul.f32 %v441, %v600
        %v603 = vadd.f32 %v597, %v601
        %v604 = vadd.f32 %v598, %v602
        %v605 = vld [vmem:[%s462 + $0xe] sm:$0x1]
        %v606 = vperm.slane %v605, 0
        %v607 = vmul.f32 %v425, %v606
        %v608 = vmul.f32 %v426, %v606
        %v609 = vadd.f32 %v603, %v607
        %v610 = vadd.f32 %v604, %v608
        %v611 = vld [vmem:[%s462 + $0x13] sm:$0x1]
        %v612 = vperm.slane %v611, 0
        %v613 = vmul.f32 %v446, %v612
        %v614 = vmul.f32 %v447, %v612
        %v615 = vadd.f32 %v609, %v613
        %v616 = vadd.f32 %v610, %v614
        %v617 = vld [vmem:[%s462 + $0x18] sm:$0x1]
        %v618 = vperm.slane %v617, 0
        %v619 = vmul.f32 %v455, %v618
        %v620 = vmul.f32 %v456, %v618
        %v621 = vadd.f32 %v615, %v619
        %v622 = vadd.f32 %v616, %v620
        %623 = vrot.lane.b32.xlu0 %v621, 112
        %v624 = vpop.permute.xlu0 %623
        %625 = vrot.lane.b32.xlu0 %v622, 112
        %v626 = vpop.permute.xlu0 %625
        %v627 = vadd.f32 %v593, %v624
        %v628 = vadd.f32 %v594, %v626
        %s629 = scalar_lea.vmem %s202, 32 [#allocation2]
        %v630 = vld [vmem:[%s629] sm:$0xff]
        %v631 = vld [vmem:[%s629 + $0x8] sm:$0xff]
        %v632 = vmul.f32 %v627, %v630
        %v633 = vmul.f32 %v628, %v631
        %s634 = scalar_lea.vmem %s232, 32 [#allocation5]
        %635 = vst [vmem:[%s634] sm:$0xff] %v632
        %636 = vst [vmem:[%s634 + $0x8] sm:$0xff] %v633
        %s637 = scalar_lea.vmem %s237, 48
        %v638 = vld [vmem:[%s637] sm:$0xff]
        %v639 = vld [vmem:[%s637 + $0x8] sm:$0xff]
        %v640 = vrot.slane %v638, 6
        %v641 = vrot.slane %v639, 6
        %v642 = vsel %vm429, %v640, %v641
        %v643 = vsel %vm429, %v641, %v640
        %v644 = vsel %vm432, %v643, 0.0
        %v645 = vsel %vm433, %v642, 0.0
        %v646 = vrot.slane %v638, 7
        %v647 = vrot.slane %v639, 7
        %v648 = vsel %vm245, %v646, %v647
        %v649 = vsel %vm245, %v647, %v646
        %v650 = vsel %vm248, %v649, 0.0
        %v651 = vsel %vm249, %v648, 0.0
        %v652 = vrot.slane %v638, 1
        %v653 = vrot.slane %v639, 1
        %v654 = vsel %vm254, %v652, %v653
        %v655 = vsel %vm254, %v653, %v652
        %v656 = vsel %vm257, %v654, 0.0
        %v657 = vsel %vm258, %v655, 0.0
        %v658 = vrot.slane %v638, 2
        %v659 = vrot.slane %v639, 2
        %v660 = vsel %vm450, %v658, %v659
        %v661 = vsel %vm450, %v659, %v658
        %v662 = vsel %vm453, %v660, 0.0
        %v663 = vsel %vm454, %v661, 0.0
        %s664 = scalar_lea.vmem %s3, 3
        %v665 = vld [vmem:[%s664] sm:$0x1]
        %v667 = vperm.slane %v665, 0
        %s669 = scalar_lea.vmem %s2, 96
        %v670 = vld [vmem:[%s669] sm:$0x1]
        %v671 = vperm.slane %v670, 0
        %v672 = vmul.f32 %v644, %v671
        %v673 = vmul.f32 %v645, %v671
        %v674 = vld [vmem:[%s669 + $0x5] sm:$0x1]
        %v675 = vperm.slane %v674, 0
        %v676 = vmul.f32 %v650, %v675
        %v677 = vmul.f32 %v651, %v675
        %v678 = vadd.f32 %v672, %v676
        %v679 = vadd.f32 %v673, %v677
        %v680 = vld [vmem:[%s669 + $0xa] sm:$0x1]
        %v681 = vperm.slane %v680, 0
        %v682 = vmul.f32 %v638, %v681
        %v683 = vmul.f32 %v639, %v681
        %v684 = vadd.f32 %v678, %v682
        %v685 = vadd.f32 %v679, %v683
        %v686 = vld [vmem:[%s669 + $0xf] sm:$0x1]
        %v687 = vperm.slane %v686, 0
        %v688 = vmul.f32 %v656, %v687
        %v689 = vmul.f32 %v657, %v687
        %v690 = vadd.f32 %v684, %v688
        %v691 = vadd.f32 %v685, %v689
        %v692 = vld [vmem:[%s669 + $0x14] sm:$0x1]
        %v693 = vperm.slane %v692, 0
        %v694 = vmul.f32 %v662, %v693
        %v695 = vmul.f32 %v663, %v693
        %v696 = vadd.f32 %v690, %v694
        %v697 = vadd.f32 %v691, %v695
        %698 = vrot.lane.b32.xlu0 %v696, 16
        %v699 = vpop.permute.xlu0 %698
        %700 = vrot.lane.b32.xlu0 %v697, 16
        %v701 = vpop.permute.xlu0 %700
        %v702 = vadd.f32 %v667, %v699
        %v703 = vadd.f32 %v667, %v701
        %v704 = vld [vmem:[%s669 + $0x1] sm:$0x1]
        %v705 = vperm.slane %v704, 0
        %v706 = vmul.f32 %v644, %v705
        %v707 = vmul.f32 %v645, %v705
        %v708 = vld [vmem:[%s669 + $0x6] sm:$0x1]
        %v709 = vperm.slane %v708, 0
        %v710 = vmul.f32 %v650, %v709
        %v711 = vmul.f32 %v651, %v709
        %v712 = vadd.f32 %v706, %v710
        %v713 = vadd.f32 %v707, %v711
        %v714 = vld [vmem:[%s669 + $0xb] sm:$0x1]
        %v715 = vperm.slane %v714, 0
        %v716 = vmul.f32 %v638, %v715
        %v717 = vmul.f32 %v639, %v715
        %v718 = vadd.f32 %v712, %v716
        %v719 = vadd.f32 %v713, %v717
        %v720 = vld [vmem:[%s669 + $0x10] sm:$0x1]
        %v721 = vperm.slane %v720, 0
        %v722 = vmul.f32 %v656, %v721
        %v723 = vmul.f32 %v657, %v721
        %v724 = vadd.f32 %v718, %v722
        %v725 = vadd.f32 %v719, %v723
        %v726 = vld [vmem:[%s669 + $0x15] sm:$0x1]
        %v727 = vperm.slane %v726, 0
        %v728 = vmul.f32 %v662, %v727
        %v729 = vmul.f32 %v663, %v727
        %v730 = vadd.f32 %v724, %v728
        %v731 = vadd.f32 %v725, %v729
        %732 = vrot.lane.b32.xlu0 %v730, 8
        %v733 = vpop.permute.xlu0 %732
        %734 = vrot.lane.b32.xlu0 %v731, 8
        %v735 = vpop.permute.xlu0 %734
        %v736 = vadd.f32 %v702, %v733
        %v737 = vadd.f32 %v703, %v735
        %v738 = vld [vmem:[%s669 + $0x2] sm:$0x1]
        %v739 = vperm.slane %v738, 0
        %v740 = vmul.f32 %v644, %v739
        %v741 = vmul.f32 %v645, %v739
        %v742 = vld [vmem:[%s669 + $0x7] sm:$0x1]
        %v743 = vperm.slane %v742, 0
        %v744 = vmul.f32 %v650, %v743
        %v745 = vmul.f32 %v651, %v743
        %v746 = vadd.f32 %v740, %v744
        %v747 = vadd.f32 %v741, %v745
        %v748 = vld [vmem:[%s669 + $0xc] sm:$0x1]
        %v749 = vperm.slane %v748, 0
        %v750 = vmul.f32 %v638, %v749
        %v751 = vmul.f32 %v639, %v749
        %v752 = vadd.f32 %v746, %v750
        %v753 = vadd.f32 %v747, %v751
        %v754 = vld [vmem:[%s669 + $0x11] sm:$0x1]
        %v755 = vperm.slane %v754, 0
        %v756 = vmul.f32 %v656, %v755
        %v757 = vmul.f32 %v657, %v755
        %v758 = vadd.f32 %v752, %v756
        %v759 = vadd.f32 %v753, %v757
        %v760 = vld [vmem:[%s669 + $0x16] sm:$0x1]
        %v761 = vperm.slane %v760, 0
        %v762 = vmul.f32 %v662, %v761
        %v763 = vmul.f32 %v663, %v761
        %v764 = vadd.f32 %v758, %v762
        %v765 = vadd.f32 %v759, %v763
        %v766 = vadd.f32 %v736, %v764
        %v767 = vadd.f32 %v737, %v765
        %v768 = vld [vmem:[%s669 + $0x3] sm:$0x1]
        %v769 = vperm.slane %v768, 0
        %v770 = vmul.f32 %v644, %v769
        %v771 = vmul.f32 %v645, %v769
        %v772 = vld [vmem:[%s669 + $0x8] sm:$0x1]
        %v773 = vperm.slane %v772, 0
        %v774 = vmul.f32 %v650, %v773
        %v775 = vmul.f32 %v651, %v773
        %v776 = vadd.f32 %v770, %v774
        %v777 = vadd.f32 %v771, %v775
        %v778 = vld [vmem:[%s669 + $0xd] sm:$0x1]
        %v779 = vperm.slane %v778, 0
        %v780 = vmul.f32 %v638, %v779
        %v781 = vmul.f32 %v639, %v779
        %v782 = vadd.f32 %v776, %v780
        %v783 = vadd.f32 %v777, %v781
        %v784 = vld [vmem:[%s669 + $0x12] sm:$0x1]
        %v785 = vperm.slane %v784, 0
        %v786 = vmul.f32 %v656, %v785
        %v787 = vmul.f32 %v657, %v785
        %v788 = vadd.f32 %v782, %v786
        %v789 = vadd.f32 %v783, %v787
        %v790 = vld [vmem:[%s669 + $0x17] sm:$0x1]
        %v791 = vperm.slane %v790, 0
        %v792 = vmul.f32 %v662, %v791
        %v793 = vmul.f32 %v663, %v791
        %v794 = vadd.f32 %v788, %v792
        %v795 = vadd.f32 %v789, %v793
        %796 = vrot.lane.b32.xlu0 %v794, 120
        %v797 = vpop.permute.xlu0 %796
        %798 = vrot.lane.b32.xlu0 %v795, 120
        %v799 = vpop.permute.xlu0 %798
        %v800 = vadd.f32 %v766, %v797
        %v801 = vadd.f32 %v767, %v799
        %v802 = vld [vmem:[%s669 + $0x4] sm:$0x1]
        %v803 = vperm.slane %v802, 0
        %v804 = vmul.f32 %v644, %v803
        %v805 = vmul.f32 %v645, %v803
        %v806 = vld [vmem:[%s669 + $0x9] sm:$0x1]
        %v807 = vperm.slane %v806, 0
        %v808 = vmul.f32 %v650, %v807
        %v809 = vmul.f32 %v651, %v807
        %v810 = vadd.f32 %v804, %v808
        %v811 = vadd.f32 %v805, %v809
        %v812 = vld [vmem:[%s669 + $0xe] sm:$0x1]
        %v813 = vperm.slane %v812, 0
        %v814 = vmul.f32 %v638, %v813
        %v815 = vmul.f32 %v639, %v813
        %v816 = vadd.f32 %v810, %v814
        %v817 = vadd.f32 %v811, %v815
        %v818 = vld [vmem:[%s669 + $0x13] sm:$0x1]
        %v819 = vperm.slane %v818, 0
        %v820 = vmul.f32 %v656, %v819
        %v821 = vmul.f32 %v657, %v819
        %v822 = vadd.f32 %v816, %v820
        %v823 = vadd.f32 %v817, %v821
        %v824 = vld [vmem:[%s669 + $0x18] sm:$0x1]
        %v825 = vperm.slane %v824, 0
        %v826 = vmul.f32 %v662, %v825
        %v827 = vmul.f32 %v663, %v825
        %v828 = vadd.f32 %v822, %v826
        %v829 = vadd.f32 %v823, %v827
        %830 = vrot.lane.b32.xlu0 %v828, 112
        %v831 = vpop.permute.xlu0 %830
        %832 = vrot.lane.b32.xlu0 %v829, 112
        %v833 = vpop.permute.xlu0 %832
        %v834 = vadd.f32 %v800, %v831
        %v835 = vadd.f32 %v801, %v833
        %s836 = scalar_lea.vmem %s202, 48 [#allocation2]
        %v837 = vld [vmem:[%s836] sm:$0xff]
        %v838 = vld [vmem:[%s836 + $0x8] sm:$0xff]
        %v839 = vmul.f32 %v834, %v837
        %v840 = vmul.f32 %v835, %v838
        %s841 = scalar_lea.vmem %s232, 48 [#allocation5]
        %842 = vst [vmem:[%s841] sm:$0xff] %v839
        %843 = vst [vmem:[%s841 + $0x8] sm:$0xff] %v840
        %s844 = sand.u32 %s123, 1
        %s845 = scalar_lea.sflag [#allocation4], %s844
        %s846 = sand.u32 %s123, 1
        %s847 = smul.addr %s846, 64
        %s848 = scalar_lea.vmem [#allocation5], %s847
        // Predicated region
        $region41: #{tpu_custom_call.1} parent=35 // pred_check
          %p849 = pneg %p133
        $region42: #{tpu_custom_call.1} parent=35 // pred_check_branch
          %851 = sbr.rel (%p849) target = $region44
        $region43: #{tpu_custom_call.1} parent=35 // pred_region
          %853 = vsyncadd %s845, 0
          %s854 = smul.addr %s21, 8
          %s855 = smul.addr %s854, 8
          %s856 = scalar_lea.hbm %s4, %s855
          %s857 = sshll.u32 %s848, 4
          %s858 = int_to_ptr.vmem [resolvable:$true] %s857
          %s859 = sshll.u32 %s856, 4
          %s860 = int_to_ptr.hbm [resolvable:$true] %s859
          %865 = dma.vmem_to_hbm [thread:$0]  %s858, 1024, %s860, %s845, 128, 128, 8
        $region44: #{tpu_custom_call.1} parent=35 // pred_fallthru
          _
      $region36: #{tpu_custom_call.1} parent=5 // pred_fallthru
        _
      %p866 = scmp.le.s32.totalorder 2, %s16
      // Predicated region
      $region45: #{tpu_custom_call.1} parent=5 // pred_check
        %p867 = pneg %p866
      $region46: #{tpu_custom_call.1} parent=5 // pred_check_branch
        %869 = sbr.rel (%p867) target = $region48
      $region47: #{tpu_custom_call.1} parent=5 // pred_region
        %s870 = ssub.s32 %s16, 2
        // Predicated region
        $region49: #{tpu_custom_call.1} parent=47 // pred_check
          %p871 = pneg %p139
        $region50: #{tpu_custom_call.1} parent=47 // pred_check_branch
          %873 = sbr.rel (%p871) target = $region52
        $region51: #{tpu_custom_call.1} parent=47 // pred_region
          %s874 = sand.u32 %s124, 1
          %s875 = scalar_lea.sflag [#allocation4], %s874
          %s876 = sand.u32 %s124, 1
          %s877 = smul.addr %s876, 64
          %s878 = scalar_lea.vmem [#allocation5], %s877
          %880 = dma.done %s875, 1024
        $region52: #{tpu_custom_call.1} parent=47 // pred_fallthru
          _
      $region48: #{tpu_custom_call.1} parent=5 // pred_fallthru
        _
    $region6: #{tpu_custom_call.1} parent=1 // loop_footer
      %s20 = sadd.s32 1, %s16
    $region7: #{tpu_custom_call.1} parent=1 // loop_footer_branch
      %15 = sbr.rel target = $region3
    $region8: #{tpu_custom_call.1} parent=1 // loop_exit
      _
    %881 = vsyncpa [#allocation3], 1
    %s882 = scalar_lea.sflag [#allocation3], 1
    %883 = vsyncpa %s882, 1
    %884 = vsyncpa [#allocation4], 1
    %s885 = scalar_lea.sflag [#allocation4], 1
    %886 = vsyncpa %s885, 1

</llo_original>
